<compile_context>
chip_gen: v5e
topology: v5e:2x2
jax: 0.10.0
libtpu: 0.0.40
codegen_flags: <defaults>
</compile_context>

<pallas_src>
import functools

import jax
import jax.numpy as jnp
from jax.experimental import pallas as pl
from jax.experimental.pallas import tpu as pltpu

LRELU_SLOPE = 0.1


def get_padding(kernel_size, dilation=1):
    return int((kernel_size * dilation - dilation) / 2)


def _round_up(x, m):
    return (x + m - 1) // m * m


def _vmem_capacity_bytes():
    try:
        return int(pltpu.get_tpu_info().vmem_capacity_bytes)
    except Exception:
        return 64 * 1024 * 1024  # conservative: v7x per-TensorCore VMEM


def _tile_bytes(shape, dtype):
    """VMEM footprint of one tile, including (sublane, lane) layout padding."""
    it = jnp.dtype(dtype).itemsize
    dims = [int(d) for d in shape]
    if len(dims) == 0:
        return 4
    if len(dims) == 1:
        return _round_up(dims[0], 128) * it
    lead = 1
    for d in dims[:-2]:
        lead *= d
    sub = _round_up(dims[-2], max((8 * 4) // it, 8))
    lane = _round_up(dims[-1], 128)
    return lead * sub * lane * it


def _conv_kernel(xp_ref, w_ref, b_ref, o_ref, *, k, stride, h_cmp, tn, cin, tco,
                 apply_lrelu, lane_dense_out):
    """One grid step = TN (batch, period-column) elements x one Cout tile.

    xp_ref : (TN, stride, H_q, Cin)  phase-decomposed, zero-padded input (bf16)
    w_ref  : (k*Cin, TCO)            bf16
    b_ref  : (1, TCO)                float32
    o_ref  : (TN, h_cmp, TCO)   or   (TN, 1, h_cmp) when lane_dense_out (tco==1)
    """
    tm = tn * h_cmp
    if cin == 1:
        # Degenerate contraction (layer 1): broadcast outer product on the VPU,
        # accumulated in register/value form (no VMEM scratch RMW).
        # TODO(synk): rework this layer lane-dense (squeeze the channel axis so
        # H maps to lanes) to remove the 128x lane padding on its input tile.
        y = None
        for kh in range(k):                      # static, unrolled tap loop
            r, off = kh % stride, kh // stride
            xs = xp_ref[:, r, pl.ds(off, h_cmp), :].reshape(tm, 1).astype(jnp.float32)
            wk = w_ref[pl.ds(kh, 1), :].astype(jnp.float32)      # (1, tco)
            d = xs * wk
            y = d if y is None else y + d
    else:
        # im2row tap fusion: one (TM, k*Cin) x (k*Cin, TCO) MXU matmul.
        pieces = []
        for kh in range(k):                      # static, unrolled tap gather
            r, off = kh % stride, kh // stride
            pieces.append(xp_ref[:, r, pl.ds(off, h_cmp), :])    # (tn, h_cmp, cin)
        slab = jnp.concatenate(pieces, axis=-1).reshape(tm, k * cin)
        y = jnp.dot(slab, w_ref[...], preferred_element_type=jnp.float32)

    y = y + b_ref[...]
    if apply_lrelu:
        y = jnp.where(y >= 0, y, LRELU_SLOPE * y)
    if lane_dense_out:
        o_ref[...] = y.reshape(tn, 1, h_cmp).astype(o_ref.dtype)
    else:
        o_ref[...] = y.reshape(tn, h_cmp, tco).astype(o_ref.dtype)


def conv_kx1(x, w, b, *, k, stride, pad, apply_lrelu, out_dtype):
    """x: (N, H, Cin); w: (k, Cin, Cout) f32; b: (Cout,) f32 -> (N, H_out, Cout)."""
    N, H, Cin = x.shape
    Cout = w.shape[2]
    H_pad = H + 2 * pad
    H_out = (H_pad - k) // stride + 1
    assert H_out >= 1
    cdt = jnp.bfloat16                            # MXU feed dtype

    # Row count rounded to 16 so the in-kernel reshapes are tile aligned for
    # both f32 (8,128) and bf16 (16,128) layouts; extra rows compute garbage
    # from the zero padding and are sliced off outside the kernel.
    h_cmp = _round_up(H_out, 16)
    off_max = (k - 1) // stride
    H_q = max(off_max + h_cmp, -(-H_pad // stride))
    total_rows = H_q * stride

    cap = _vmem_capacity_bytes()
    budget = max(16 << 20, min(cap // 2 - (8 << 20), 96 << 20))

    def usage(tn, tco):
        xp_b = _tile_bytes((tn, stride, H_q, Cin), cdt)
        w_b = _tile_bytes((k * Cin, tco), cdt)
        b_b = _tile_bytes((1, tco), jnp.float32)
        o_b = _tile_bytes((tn, h_cmp, tco), out_dtype)
        slab_b = _tile_bytes((tn * h_cmp, k * Cin), cdt)      # im2row slab temp
        res_b = _tile_bytes((tn * h_cmp, tco), jnp.float32)   # dot result temp
        return 2 * (xp_b + o_b) + 2 * (w_b + b_b) + slab_b + res_b

    # Cout tiling: full Cout when the budget allows (xp DMA'd once, half the grid
    # steps: v5e/v6e); otherwise 512-wide tiles (v7x's 64 MiB VMEM).
    tco_candidates = [Cout]
    if Cout > 512 and Cout % 512 == 0:
        tco_candidates.append(512)
    tn_target = max(1, min(N, -(-512 // h_cmp)))   # target ~512 MXU rows per step
    tn, tco = 1, tco_candidates[-1]
    for cand in tco_candidates:
        t = tn_target
        while t > 1 and usage(t, cand) > budget:
            t -= 1
        if usage(t, cand) <= budget:
            tn, tco = t, cand
            break
    # TODO(synk): for extremely long inputs even tn=1 may exceed the budget; that
    # case needs an H_out row-tile grid axis with a (k-1)-row halo.
    co_tiles = Cout // tco
    # Keep at least 2 grid steps on a parallel axis so both v7x TensorCores work.
    if co_tiles == 1 and N >= 2 and tn >= N:
        tn = (N + 1) // 2
    n_pad = _round_up(N, tn)
    need = usage(tn, tco)
    vmem_limit = int(min(cap - (8 << 20), max(2 * need + (8 << 20), 32 << 20)))

    # Zero-pad columns/rows, cast to bf16, phase-split:
    #   xp[n, r, q, c] = x_padded[n, q*stride + r, c]
    # TODO(synk): fold the phase-split transpose (and pad) into the kernel with
    # strided pl.ds loads to kill this remaining wrapper-side HBM round trip.
    xz = jnp.pad(x.astype(cdt), ((0, n_pad - N), (pad, total_rows - H - pad), (0, 0)))
    xp = xz.reshape(n_pad, H_q, stride, Cin).transpose(0, 2, 1, 3)
    wq = w.reshape(k * Cin, Cout).astype(cdt)      # contiguous reshape, free
    b2 = b.reshape(1, Cout).astype(jnp.float32)

    def run(single_buffer_w, lane_dense):
        kern = functools.partial(
            _conv_kernel, k=k, stride=stride, h_cmp=h_cmp, tn=tn, cin=Cin, tco=tco,
            apply_lrelu=apply_lrelu, lane_dense_out=lane_dense)
        pm = {"pipeline_mode": pl.Buffered(1)} if single_buffer_w else {}
        w_spec = pl.BlockSpec((k * Cin, tco), lambda co, n: (0, co), **pm)
        b_spec = pl.BlockSpec((1, tco), lambda co, n: (0, co), **pm)
        if lane_dense:                                   # Cout == 1 (conv_post)
            out_shape = jax.ShapeDtypeStruct((n_pad, 1, h_cmp), out_dtype)
            out_spec = pl.BlockSpec((tn, 1, h_cmp), lambda co, n: (n, 0, 0))
        else:
            out_shape = jax.ShapeDtypeStruct((n_pad, h_cmp, Cout), out_dtype)
            out_spec = pl.BlockSpec((tn, h_cmp, tco), lambda co, n: (n, 0, co))
        out = pl.pallas_call(
            kern,
            out_shape=out_shape,
            grid=(co_tiles, n_pad // tn),   # n fastest -> weight block resident per co sweep
            in_specs=[
                pl.BlockSpec((tn, stride, H_q, Cin), lambda co, n: (n, 0, 0, 0)),
                w_spec,
                b_spec,
            ],
            out_specs=out_spec,
            compiler_params=pltpu.CompilerParams(
                dimension_semantics=("parallel", "parallel"),
                vmem_limit_bytes=vmem_limit,
            ),
        )(xp, wq, b2)
        if lane_dense:
            return out[:N, 0, :H_out][:, :, None]        # (N, H_out, 1)
        return out[:N, :H_out, :]

    try:
        return run(True, Cout == 1)
    except Exception:
        # Fallback if this jax build rejects pipeline_mode=pl.Buffered(1) or the
        # lane-dense (tn, 1, h_cmp) store layout: double-buffered weights +
        # standard channel-minor output. Semantics identical.
        return run(False, False)


def init_discriminator_p_params(key, kernel_size=5):
    # weight_norm is a reparametrization; at forward time it is just a dense
    # weight, so we initialize plain (k, Cin, Cout) weights deterministically.
    chans = [(1, 32), (32, 128), (128, 512), (512, 1024), (1024, 1024)]
    params = {"convs": []}
    for (ci, co) in chans:
        key, k1, k2 = jax.random.split(key, 3)
        w = 0.02 * jax.random.normal(k1, (kernel_size, ci, co), jnp.float32)
        b = 0.01 * jax.random.normal(k2, (co,), jnp.float32)
        params["convs"].append((w, b))
    key, k1, k2 = jax.random.split(key, 3)
    params["conv_post"] = (
        0.02 * jax.random.normal(k1, (3, 1024, 1), jnp.float32),
        0.01 * jax.random.normal(k2, (1,), jnp.float32),
    )
    return params


def discriminator_p_forward(y, params, period, kernel_size=5, stride=3):
    """y: (B, 1, T) float32. Returns (y_d, fmap) matching the PyTorch module."""
    B, C, T = y.shape
    if T % period != 0:
        n_pad = period - T % period
        assert n_pad < T, "reflect padding requires n_pad < T (same as PyTorch)"
        y = jnp.pad(y, ((0, 0), (0, 0), (0, n_pad)), mode="reflect")
        T = T + n_pad
    H = T // period
    # torch view (B, 1, H, period) -> our (N=B*period, H, C=1) layout
    x = y.reshape(B, H, period).transpose(0, 2, 1).reshape(B * period, H, 1)

    def to_nchw(z):  # (B*period, Hc, Cc) -> (B, Cc, Hc, period), matching torch fmap
        Hc, Cc = z.shape[1], z.shape[2]
        return z.reshape(B, period, Hc, Cc).transpose(0, 3, 2, 1)

    fmap = []
    pad = get_padding(kernel_size, 1)
    strides = [stride, stride, stride, stride, 1]
    for (w, b), s in zip(params["convs"], strides):
        # Hidden activations / fmaps are bf16 (f32 bias+lrelu, bf16 store) so the
        # next layer reads half the bytes; conv_post logits stay f32.
        x = conv_kx1(x, w, b, k=kernel_size, stride=s, pad=pad,
                     apply_lrelu=True, out_dtype=jnp.bfloat16)
        fmap.append(to_nchw(x))

    wp, bp = params["conv_post"]
    x = conv_kx1(x, wp, bp, k=3, stride=1, pad=1,
                 apply_lrelu=False, out_dtype=jnp.float32)
    fmap.append(to_nchw(x))

    Hf = x.shape[1]  # x: (B*period, Hf, 1)
    y_d = x.reshape(B, period, Hf).transpose(0, 2, 1).reshape(B, Hf * period)
    return y_d, fmap


def mpd_forward(y, params_list, periods):
    y_ds, fmaps = [], []
    for p, params in zip(periods, params_list):
        y_d, fmap = discriminator_p_forward(y, params, p)
        y_ds.append(y_d)
        fmaps.append(fmap)
    return y_ds, fmaps


if __name__ == "__main__":
    periods = [2, 3, 5, 7, 11]
    key = jax.random.PRNGKey(0)
    key, yk = jax.random.split(key)

    B, T = 2, 160
    y = jax.random.normal(yk, (B, 1, T), jnp.float32)

    params_list = []
    for _ in periods:
        key, sk = jax.random.split(key)
        params_list.append(init_discriminator_p_params(sk))

    y_ds, fmaps = mpd_forward(y, params_list, periods)

    for yd in y_ds:
        jax.block_until_ready(yd)
    for fmap in fmaps:
        for f in fmap:
            jax.block_until_ready(f)

    print("KERNEL_OK")
</pallas_src>

<mosaic_0001>
module attributes {stable_mosaic.version = 11 : i64} {
  func.func @_conv_kernel(%arg0: i32, %arg1: i32, %arg2: memref<2x3x33x1xbf16, #tpu.memory_space<vmem>>, %arg3: memref<5x32xbf16, #tpu.memory_space<vmem>>, %arg4: memref<1x32xf32, #tpu.memory_space<vmem>>, %arg5: memref<2x32x32xbf16, #tpu.memory_space<vmem>>) attributes {dimension_semantics = [#tpu.dimension_semantics<parallel>, #tpu.dimension_semantics<parallel>], iteration_bounds = array<i64: 1, 2>, scalar_prefetch = 0 : i64, scratch_operands = 0 : i64, tpu.core_type = #tpu.core_type<tc>, window_params = [{transform_indices = @transform_0, window_bounds = array<i64: 2, 3, 33, 1>}, {pipeline_mode = #tpu.pipeline_mode<synchronous>, transform_indices = @transform_1, window_bounds = array<i64: 5, 32>}, {pipeline_mode = #tpu.pipeline_mode<synchronous>, transform_indices = @transform_2, window_bounds = array<i64: 1, 32>}, {transform_indices = @transform_3, window_bounds = array<i64: 2, 32, 32>}]} {
    %c0 = arith.constant 0 : index
    %c0_0 = arith.constant 0 : index
    %c0_1 = arith.constant 0 : index
    %c0_2 = arith.constant 0 : index
    %0 = vector.load %arg2[%c0, %c0_0, %c0_1, %c0_2] : memref<2x3x33x1xbf16, #tpu.memory_space<vmem>>, vector<2x1x32x1xbf16>
    %1 = vector.shape_cast %0 : vector<2x1x32x1xbf16> to vector<2x32x1xbf16>
    %2 = vector.shape_cast %1 : vector<2x32x1xbf16> to vector<64x1xbf16>
    %3 = arith.extf %2 : vector<64x1xbf16> to vector<64x1xf32>
    %c0_3 = arith.constant 0 : index
    %c0_4 = arith.constant 0 : index
    %4 = vector.load %arg3[%c0_3, %c0_4] : memref<5x32xbf16, #tpu.memory_space<vmem>>, vector<1x32xbf16>
    %5 = arith.extf %4 : vector<1x32xbf16> to vector<1x32xf32>
    %6 = vector.broadcast %3 : vector<64x1xf32> to vector<64x32xf32>
    %7 = vector.broadcast %5 : vector<1x32xf32> to vector<64x32xf32>
    %8 = arith.mulf %6, %7 : vector<64x32xf32>
    %c0_5 = arith.constant 0 : index
    %c1 = arith.constant 1 : index
    %c0_6 = arith.constant 0 : index
    %c0_7 = arith.constant 0 : index
    %9 = vector.load %arg2[%c0_5, %c1, %c0_6, %c0_7] : memref<2x3x33x1xbf16, #tpu.memory_space<vmem>>, vector<2x1x32x1xbf16>
    %10 = vector.shape_cast %9 : vector<2x1x32x1xbf16> to vector<2x32x1xbf16>
    %11 = vector.shape_cast %10 : vector<2x32x1xbf16> to vector<64x1xbf16>
    %12 = arith.extf %11 : vector<64x1xbf16> to vector<64x1xf32>
    %c1_8 = arith.constant 1 : index
    %c0_9 = arith.constant 0 : index
    %13 = vector.load %arg3[%c1_8, %c0_9] : memref<5x32xbf16, #tpu.memory_space<vmem>>, vector<1x32xbf16>
    %14 = arith.extf %13 : vector<1x32xbf16> to vector<1x32xf32>
    %15 = vector.broadcast %12 : vector<64x1xf32> to vector<64x32xf32>
    %16 = vector.broadcast %14 : vector<1x32xf32> to vector<64x32xf32>
    %17 = arith.mulf %15, %16 : vector<64x32xf32>
    %18 = arith.addf %8, %17 : vector<64x32xf32>
    %c0_10 = arith.constant 0 : index
    %c2 = arith.constant 2 : index
    %c0_11 = arith.constant 0 : index
    %c0_12 = arith.constant 0 : index
    %19 = vector.load %arg2[%c0_10, %c2, %c0_11, %c0_12] : memref<2x3x33x1xbf16, #tpu.memory_space<vmem>>, vector<2x1x32x1xbf16>
    %20 = vector.shape_cast %19 : vector<2x1x32x1xbf16> to vector<2x32x1xbf16>
    %21 = vector.shape_cast %20 : vector<2x32x1xbf16> to vector<64x1xbf16>
    %22 = arith.extf %21 : vector<64x1xbf16> to vector<64x1xf32>
    %c2_13 = arith.constant 2 : index
    %c0_14 = arith.constant 0 : index
    %23 = vector.load %arg3[%c2_13, %c0_14] : memref<5x32xbf16, #tpu.memory_space<vmem>>, vector<1x32xbf16>
    %24 = arith.extf %23 : vector<1x32xbf16> to vector<1x32xf32>
    %25 = vector.broadcast %22 : vector<64x1xf32> to vector<64x32xf32>
    %26 = vector.broadcast %24 : vector<1x32xf32> to vector<64x32xf32>
    %27 = arith.mulf %25, %26 : vector<64x32xf32>
    %28 = arith.addf %18, %27 : vector<64x32xf32>
    %c0_15 = arith.constant 0 : index
    %c0_16 = arith.constant 0 : index
    %c1_17 = arith.constant 1 : index
    %c0_18 = arith.constant 0 : index
    %29 = vector.load %arg2[%c0_15, %c0_16, %c1_17, %c0_18] : memref<2x3x33x1xbf16, #tpu.memory_space<vmem>>, vector<2x1x32x1xbf16>
    %30 = vector.shape_cast %29 : vector<2x1x32x1xbf16> to vector<2x32x1xbf16>
    %31 = vector.shape_cast %30 : vector<2x32x1xbf16> to vector<64x1xbf16>
    %32 = arith.extf %31 : vector<64x1xbf16> to vector<64x1xf32>
    %c3 = arith.constant 3 : index
    %c0_19 = arith.constant 0 : index
    %33 = vector.load %arg3[%c3, %c0_19] : memref<5x32xbf16, #tpu.memory_space<vmem>>, vector<1x32xbf16>
    %34 = arith.extf %33 : vector<1x32xbf16> to vector<1x32xf32>
    %35 = vector.broadcast %32 : vector<64x1xf32> to vector<64x32xf32>
    %36 = vector.broadcast %34 : vector<1x32xf32> to vector<64x32xf32>
    %37 = arith.mulf %35, %36 : vector<64x32xf32>
    %38 = arith.addf %28, %37 : vector<64x32xf32>
    %c0_20 = arith.constant 0 : index
    %c1_21 = arith.constant 1 : index
    %c1_22 = arith.constant 1 : index
    %c0_23 = arith.constant 0 : index
    %39 = vector.load %arg2[%c0_20, %c1_21, %c1_22, %c0_23] : memref<2x3x33x1xbf16, #tpu.memory_space<vmem>>, vector<2x1x32x1xbf16>
    %40 = vector.shape_cast %39 : vector<2x1x32x1xbf16> to vector<2x32x1xbf16>
    %41 = vector.shape_cast %40 : vector<2x32x1xbf16> to vector<64x1xbf16>
    %42 = arith.extf %41 : vector<64x1xbf16> to vector<64x1xf32>
    %c4 = arith.constant 4 : index
    %c0_24 = arith.constant 0 : index
    %43 = vector.load %arg3[%c4, %c0_24] : memref<5x32xbf16, #tpu.memory_space<vmem>>, vector<1x32xbf16>
    %44 = arith.extf %43 : vector<1x32xbf16> to vector<1x32xf32>
    %45 = vector.broadcast %42 : vector<64x1xf32> to vector<64x32xf32>
    %46 = vector.broadcast %44 : vector<1x32xf32> to vector<64x32xf32>
    %47 = arith.mulf %45, %46 : vector<64x32xf32>
    %48 = arith.addf %38, %47 : vector<64x32xf32>
    %c0_25 = arith.constant 0 : index
    %c0_26 = arith.constant 0 : index
    %49 = vector.load %arg4[%c0_25, %c0_26] : memref<1x32xf32, #tpu.memory_space<vmem>>, vector<1x32xf32>
    %50 = vector.broadcast %49 : vector<1x32xf32> to vector<64x32xf32>
    %51 = arith.addf %48, %50 : vector<64x32xf32>
    %cst = arith.constant 0.000000e+00 : f32
    %52 = vector.broadcast %cst : f32 to vector<64x32xf32>
    %53 = arith.cmpf oge, %51, %52 : vector<64x32xf32>
    %cst_27 = arith.constant 1.000000e-01 : f32
    %54 = vector.broadcast %cst_27 : f32 to vector<64x32xf32>
    %55 = arith.mulf %54, %51 : vector<64x32xf32>
    %56 = arith.select %53, %51, %55 : vector<64x32xi1>, vector<64x32xf32>
    %57 = vector.shape_cast %56 : vector<64x32xf32> to vector<2x32x32xf32>
    %58 = arith.truncf %57 : vector<2x32x32xf32> to vector<2x32x32xbf16>
    %c0_28 = arith.constant 0 : index
    %c0_29 = arith.constant 0 : index
    %c0_30 = arith.constant 0 : index
    %59 = vector.load %arg5[%c0_28, %c0_29, %c0_30] : memref<2x32x32xbf16, #tpu.memory_space<vmem>>, vector<2x32x32xbf16>
    tpu.vector_store %arg5[%c0_28, %c0_29, %c0_30], %58 {strides = array<i32>} : memref<2x32x32xbf16, #tpu.memory_space<vmem>>, vector<2x32x32xbf16>,
    return
  }
  func.func @transform_0(%arg0: i32, %arg1: i32) -> (i32, i32, i32, i32) {
    %c0_i32 = arith.constant 0 : i32
    %c0_i32_0 = arith.constant 0 : i32
    %c0_i32_1 = arith.constant 0 : i32
    %c0_i32_2 = arith.constant 0 : i32
    return %arg1, %c0_i32, %c0_i32_0, %c0_i32_1 : i32, i32, i32, i32
  }
  func.func @transform_1(%arg0: i32, %arg1: i32) -> (i32, i32) {
    %c0_i32 = arith.constant 0 : i32
    %c0_i32_0 = arith.constant 0 : i32
    return %c0_i32, %arg0 : i32, i32
  }
  func.func @transform_2(%arg0: i32, %arg1: i32) -> (i32, i32) {
    %c0_i32 = arith.constant 0 : i32
    %c0_i32_0 = arith.constant 0 : i32
    return %c0_i32, %arg0 : i32, i32
  }
  func.func @transform_3(%arg0: i32, %arg1: i32) -> (i32, i32, i32) {
    %c0_i32 = arith.constant 0 : i32
    %c0_i32_0 = arith.constant 0 : i32
    return %arg1, %c0_i32, %arg0 : i32, i32, i32
  }
}

module attributes {stable_mosaic.version = 11 : i64} {
  func.func @_conv_kernel(%arg0: i32, %arg1: i32, %arg2: memref<2x3x33x1xbf16, #tpu.memory_space<vmem>>, %arg3: memref<5x32xbf16, #tpu.memory_space<vmem>>, %arg4: memref<1x32xf32, #tpu.memory_space<vmem>>, %arg5: memref<2x32x32xbf16, #tpu.memory_space<vmem>>) attributes {dimension_semantics = [#tpu.dimension_semantics<parallel>, #tpu.dimension_semantics<parallel>], iteration_bounds = array<i64: 1, 2>, scalar_prefetch = 0 : i64, scratch_operands = 0 : i64, tpu.core_type = #tpu.core_type<tc>, window_params = [{transform_indices = @transform_0, window_bounds = array<i64: 2, 3, 33, 1>}, {transform_indices = @transform_1, window_bounds = array<i64: 5, 32>}, {transform_indices = @transform_2, window_bounds = array<i64: 1, 32>}, {transform_indices = @transform_3, window_bounds = array<i64: 2, 32, 32>}]} {
    %c0 = arith.constant 0 : index
    %c0_0 = arith.constant 0 : index
    %c0_1 = arith.constant 0 : index
    %c0_2 = arith.constant 0 : index
    %0 = vector.load %arg2[%c0, %c0_0, %c0_1, %c0_2] : memref<2x3x33x1xbf16, #tpu.memory_space<vmem>>, vector<2x1x32x1xbf16>
    %1 = vector.shape_cast %0 : vector<2x1x32x1xbf16> to vector<2x32x1xbf16>
    %2 = vector.shape_cast %1 : vector<2x32x1xbf16> to vector<64x1xbf16>
    %3 = arith.extf %2 : vector<64x1xbf16> to vector<64x1xf32>
    %c0_3 = arith.constant 0 : index
    %c0_4 = arith.constant 0 : index
    %4 = vector.load %arg3[%c0_3, %c0_4] : memref<5x32xbf16, #tpu.memory_space<vmem>>, vector<1x32xbf16>
    %5 = arith.extf %4 : vector<1x32xbf16> to vector<1x32xf32>
    %6 = vector.broadcast %3 : vector<64x1xf32> to vector<64x32xf32>
    %7 = vector.broadcast %5 : vector<1x32xf32> to vector<64x32xf32>
    %8 = arith.mulf %6, %7 : vector<64x32xf32>
    %c0_5 = arith.constant 0 : index
    %c1 = arith.constant 1 : index
    %c0_6 = arith.constant 0 : index
    %c0_7 = arith.constant 0 : index
    %9 = vector.load %arg2[%c0_5, %c1, %c0_6, %c0_7] : memref<2x3x33x1xbf16, #tpu.memory_space<vmem>>, vector<2x1x32x1xbf16>
    %10 = vector.shape_cast %9 : vector<2x1x32x1xbf16> to vector<2x32x1xbf16>
    %11 = vector.shape_cast %10 : vector<2x32x1xbf16> to vector<64x1xbf16>
    %12 = arith.extf %11 : vector<64x1xbf16> to vector<64x1xf32>
    %c1_8 = arith.constant 1 : index
    %c0_9 = arith.constant 0 : index
    %13 = vector.load %arg3[%c1_8, %c0_9] : memref<5x32xbf16, #tpu.memory_space<vmem>>, vector<1x32xbf16>
    %14 = arith.extf %13 : vector<1x32xbf16> to vector<1x32xf32>
    %15 = vector.broadcast %12 : vector<64x1xf32> to vector<64x32xf32>
    %16 = vector.broadcast %14 : vector<1x32xf32> to vector<64x32xf32>
    %17 = arith.mulf %15, %16 : vector<64x32xf32>
    %18 = arith.addf %8, %17 : vector<64x32xf32>
    %c0_10 = arith.constant 0 : index
    %c2 = arith.constant 2 : index
    %c0_11 = arith.constant 0 : index
    %c0_12 = arith.constant 0 : index
    %19 = vector.load %arg2[%c0_10, %c2, %c0_11, %c0_12] : memref<2x3x33x1xbf16, #tpu.memory_space<vmem>>, vector<2x1x32x1xbf16>
    %20 = vector.shape_cast %19 : vector<2x1x32x1xbf16> to vector<2x32x1xbf16>
    %21 = vector.shape_cast %20 : vector<2x32x1xbf16> to vector<64x1xbf16>
    %22 = arith.extf %21 : vector<64x1xbf16> to vector<64x1xf32>
    %c2_13 = arith.constant 2 : index
    %c0_14 = arith.constant 0 : index
    %23 = vector.load %arg3[%c2_13, %c0_14] : memref<5x32xbf16, #tpu.memory_space<vmem>>, vector<1x32xbf16>
    %24 = arith.extf %23 : vector<1x32xbf16> to vector<1x32xf32>
    %25 = vector.broadcast %22 : vector<64x1xf32> to vector<64x32xf32>
    %26 = vector.broadcast %24 : vector<1x32xf32> to vector<64x32xf32>
    %27 = arith.mulf %25, %26 : vector<64x32xf32>
    %28 = arith.addf %18, %27 : vector<64x32xf32>
    %c0_15 = arith.constant 0 : index
    %c0_16 = arith.constant 0 : index
    %c1_17 = arith.constant 1 : index
    %c0_18 = arith.constant 0 : index
    %29 = vector.load %arg2[%c0_15, %c0_16, %c1_17, %c0_18] : memref<2x3x33x1xbf16, #tpu.memory_space<vmem>>, vector<2x1x32x1xbf16>
    %30 = vector.shape_cast %29 : vector<2x1x32x1xbf16> to vector<2x32x1xbf16>
    %31 = vector.shape_cast %30 : vector<2x32x1xbf16> to vector<64x1xbf16>
    %32 = arith.extf %31 : vector<64x1xbf16> to vector<64x1xf32>
    %c3 = arith.constant 3 : index
    %c0_19 = arith.constant 0 : index
    %33 = vector.load %arg3[%c3, %c0_19] : memref<5x32xbf16, #tpu.memory_space<vmem>>, vector<1x32xbf16>
    %34 = arith.extf %33 : vector<1x32xbf16> to vector<1x32xf32>
    %35 = vector.broadcast %32 : vector<64x1xf32> to vector<64x32xf32>
    %36 = vector.broadcast %34 : vector<1x32xf32> to vector<64x32xf32>
    %37 = arith.mulf %35, %36 : vector<64x32xf32>
    %38 = arith.addf %28, %37 : vector<64x32xf32>
    %c0_20 = arith.constant 0 : index
    %c1_21 = arith.constant 1 : index
    %c1_22 = arith.constant 1 : index
    %c0_23 = arith.constant 0 : index
    %39 = vector.load %arg2[%c0_20, %c1_21, %c1_22, %c0_23] : memref<2x3x33x1xbf16, #tpu.memory_space<vmem>>, vector<2x1x32x1xbf16>
    %40 = vector.shape_cast %39 : vector<2x1x32x1xbf16> to vector<2x32x1xbf16>
    %41 = vector.shape_cast %40 : vector<2x32x1xbf16> to vector<64x1xbf16>
    %42 = arith.extf %41 : vector<64x1xbf16> to vector<64x1xf32>
    %c4 = arith.constant 4 : index
    %c0_24 = arith.constant 0 : index
    %43 = vector.load %arg3[%c4, %c0_24] : memref<5x32xbf16, #tpu.memory_space<vmem>>, vector<1x32xbf16>
    %44 = arith.extf %43 : vector<1x32xbf16> to vector<1x32xf32>
    %45 = vector.broadcast %42 : vector<64x1xf32> to vector<64x32xf32>
    %46 = vector.broadcast %44 : vector<1x32xf32> to vector<64x32xf32>
    %47 = arith.mulf %45, %46 : vector<64x32xf32>
    %48 = arith.addf %38, %47 : vector<64x32xf32>
    %c0_25 = arith.constant 0 : index
    %c0_26 = arith.constant 0 : index
    %49 = vector.load %arg4[%c0_25, %c0_26] : memref<1x32xf32, #tpu.memory_space<vmem>>, vector<1x32xf32>
    %50 = vector.broadcast %49 : vector<1x32xf32> to vector<64x32xf32>
    %51 = arith.addf %48, %50 : vector<64x32xf32>
    %cst = arith.constant 0.000000e+00 : f32
    %52 = vector.broadcast %cst : f32 to vector<64x32xf32>
    %53 = arith.cmpf oge, %51, %52 : vector<64x32xf32>
    %cst_27 = arith.constant 1.000000e-01 : f32
    %54 = vector.broadcast %cst_27 : f32 to vector<64x32xf32>
    %55 = arith.mulf %54, %51 : vector<64x32xf32>
    %56 = arith.select %53, %51, %55 : vector<64x32xi1>, vector<64x32xf32>
    %57 = vector.shape_cast %56 : vector<64x32xf32> to vector<2x32x32xf32>
    %58 = arith.truncf %57 : vector<2x32x32xf32> to vector<2x32x32xbf16>
    %c0_28 = arith.constant 0 : index
    %c0_29 = arith.constant 0 : index
    %c0_30 = arith.constant 0 : index
    %59 = vector.load %arg5[%c0_28, %c0_29, %c0_30] : memref<2x32x32xbf16, #tpu.memory_space<vmem>>, vector<2x32x32xbf16>
    tpu.vector_store %arg5[%c0_28, %c0_29, %c0_30], %58 {strides = array<i32>} : memref<2x32x32xbf16, #tpu.memory_space<vmem>>, vector<2x32x32xbf16>,
    return
  }
  func.func @transform_0(%arg0: i32, %arg1: i32) -> (i32, i32, i32, i32) {
    %c0_i32 = arith.constant 0 : i32
    %c0_i32_0 = arith.constant 0 : i32
    %c0_i32_1 = arith.constant 0 : i32
    %c0_i32_2 = arith.constant 0 : i32
    return %arg1, %c0_i32, %c0_i32_0, %c0_i32_1 : i32, i32, i32, i32
  }
  func.func @transform_1(%arg0: i32, %arg1: i32) -> (i32, i32) {
    %c0_i32 = arith.constant 0 : i32
    %c0_i32_0 = arith.constant 0 : i32
    return %c0_i32, %arg0 : i32, i32
  }
  func.func @transform_2(%arg0: i32, %arg1: i32) -> (i32, i32) {
    %c0_i32 = arith.constant 0 : i32
    %c0_i32_0 = arith.constant 0 : i32
    return %c0_i32, %arg0 : i32, i32
  }
  func.func @transform_3(%arg0: i32, %arg1: i32) -> (i32, i32, i32) {
    %c0_i32 = arith.constant 0 : i32
    %c0_i32_0 = arith.constant 0 : i32
    return %arg1, %c0_i32, %arg0 : i32, i32, i32
  }
}

</mosaic_0001>

<llo_original>
// kernel: tpu_custom_call.1
$region0: #{tpu_custom_call.1}
  #allocation0 [shape = 'u32[]', space=smem, size = 0x4, offset = 0x4, fixed_abs, tag = 'smem constant byte address 0x4 - core index']
  #allocation1 [shape = 'u32[72,128]{1,0:T(1,128)}', space=vmem, size = 0x9000, scoped, tag = 'internal scratch']
  %s0 = inlined_call_operand.vmem [shape: bf16[4,3,33,1], index: 0, kind: input, shape index: {}]
  %s1 = inlined_call_operand.vmem [shape: bf16[5,32], index: 1, kind: input, shape index: {}]
  %s2 = inlined_call_operand.vmem [shape: f32[1,32], index: 2, kind: input, shape index: {}]
  %s3 = inlined_call_operand.hbm [shape: bf16[4,32,32], index: 3, kind: output, shape index: {}]
  %s4 = sld [smem:[#allocation0]]
  $region45: #{tpu_custom_call.1} parent=0
    _
  %s6 = ssub.s32 1, %s4
  %s7 = scalar_select 0, %s6, %s4
  $region1: #{tpu_custom_call.1} parent=0
    #allocation2 [shape = 'u8[32768]{0}', space=vmem, size = 0x8000, scoped, tag = 'output window, operand 0']
    #allocation3 [shape = 's32[2]{0}', space=sflag, size = 0x8, scoped, tag = 'scoped memory for tpu_custom_call.1']
    %8 = vsyncpa [#allocation3], 0
    %s9 = scalar_lea.sflag [#allocation3], 1
    %10 = vsyncpa %s9, 0
    loop: start=0, step=1, limit=4
    $region2: #{tpu_custom_call.1} parent=1 // loop_pre_header
      _
    $region3: #{tpu_custom_call.1} parent=1 // loop_header
      %s12 = sphi 0, %s16
      %p13 = scmp.ge.s32.totalorder %s12, 4
      %s19 = sphi 0, %s31
      %s20 = sphi 0, %s27
      %s21 = sphi 0, %s19
      %s22 = sphi 0, %s20
      %s23 = sphi 0, %s21
      %s24 = sphi 0, %s22
      %s34 = sphi 0, %s36
      %s37 = sphi 0, %s34
      %s38 = sphi 0, %s37
      %s54 = sphi 0, %s38
      %s60 = sphi 0, %s62
      %s63 = sphi 0, %s60
      %s64 = sphi 0, %s63
      %s80 = sphi 0, %s64
      %s86 = sphi 0, %s88
      %s89 = sphi 0, %s86
      %s90 = sphi 0, %s89
      %s106 = sphi 0, %s90
      %s114 = sphi 0, %s116
      %s117 = sphi 0, %s114
      %s118 = sphi 0, %s117
      %s134 = sphi 0, %s118
    $region4: #{tpu_custom_call.1} parent=1 // loop_header_branch
      %15 = sbr.rel (%p13) target = $region8
    $region5: #{tpu_custom_call.1} parent=1 // loop_body
      %s17 = ssub.s32 %s12, 1
      %s18 = ssub.s32 %s12, 2
      %s25 = sadd.s32 1, %s20
      %p26 = scmp.ge.s32.totalorder %s25, 2
      %s27 = scalar_select %p26, 0, %s25
      %s28 = sadd.s32 1, %s19
      %s29 = scalar_select %p26, %s28, %s19
      %p30 = scmp.ge.s32.totalorder %s29, 1
      %s31 = scalar_select %p30, 0, %s29
      %s32 = ssub.s32 %s20, %s27
      %p33 = scmp.eq.s32.totalorder %s32, 0
      %s35 = sadd.s32 %s34, 1
      %s36 = scalar_select %p33, %s34, %s35
      %p39 = pneg %p33
      %p40 = scmp.eq.s32.totalorder %s12, 1
      %p41 = por %p39, %p40
      %p42 = scmp.ne.s32.totalorder %s34, %s37
      %p43 = scmp.eq.s32.totalorder %s12, 0
      %p44 = por %p42, %p43
      %p45 = scmp.ne.s32.totalorder %s34, %s37
      %p46 = scmp.eq.s32.totalorder %s17, 1
      %p47 = por %p45, %p46
      %p48 = scmp.ne.s32.totalorder %s37, %s38
      %p49 = scmp.eq.s32.totalorder %s17, 0
      %p50 = por %p48, %p49
      %p51 = scmp.ne.s32.totalorder %s37, %s38
      %p52 = scmp.eq.s32.totalorder %s18, 1
      %p53 = por %p51, %p52
      %p55 = scmp.ne.s32.totalorder %s38, %s54
      %p56 = scmp.eq.s32.totalorder %s18, 0
      %p57 = por %p55, %p56
      %s58 = ssub.s32 %s19, %s31
      %p59 = scmp.eq.s32.totalorder %s58, 0
      %s61 = sadd.s32 %s60, 1
      %s62 = scalar_select %p59, %s60, %s61
      %p65 = pneg %p59
      %p66 = scmp.eq.s32.totalorder %s12, 1
      %p67 = por %p65, %p66
      %p68 = scmp.ne.s32.totalorder %s60, %s63
      %p69 = scmp.eq.s32.totalorder %s12, 0
      %p70 = por %p68, %p69
      %p71 = scmp.ne.s32.totalorder %s60, %s63
      %p72 = scmp.eq.s32.totalorder %s17, 1
      %p73 = por %p71, %p72
      %p74 = scmp.ne.s32.totalorder %s63, %s64
      %p75 = scmp.eq.s32.totalorder %s17, 0
      %p76 = por %p74, %p75
      %p77 = scmp.ne.s32.totalorder %s63, %s64
      %p78 = scmp.eq.s32.totalorder %s18, 1
      %p79 = por %p77, %p78
      %p81 = scmp.ne.s32.totalorder %s64, %s80
      %p82 = scmp.eq.s32.totalorder %s18, 0
      %p83 = por %p81, %p82
      %s84 = ssub.s32 %s19, %s31
      %p85 = scmp.eq.s32.totalorder %s84, 0
      %s87 = sadd.s32 %s86, 1
      %s88 = scalar_select %p85, %s86, %s87
      %p91 = pneg %p85
      %p92 = scmp.eq.s32.totalorder %s12, 1
      %p93 = por %p91, %p92
      %p94 = scmp.ne.s32.totalorder %s86, %s89
      %p95 = scmp.eq.s32.totalorder %s12, 0
      %p96 = por %p94, %p95
      %p97 = scmp.ne.s32.totalorder %s86, %s89
      %p98 = scmp.eq.s32.totalorder %s17, 1
      %p99 = por %p97, %p98
      %p100 = scmp.ne.s32.totalorder %s89, %s90
      %p101 = scmp.eq.s32.totalorder %s17, 0
      %p102 = por %p100, %p101
      %p103 = scmp.ne.s32.totalorder %s89, %s90
      %p104 = scmp.eq.s32.totalorder %s18, 1
      %p105 = por %p103, %p104
      %p107 = scmp.ne.s32.totalorder %s90, %s106
      %p108 = scmp.eq.s32.totalorder %s18, 0
      %p109 = por %p107, %p108
      %s110 = ssub.s32 %s20, %s27
      %s111 = ssub.s32 %s19, %s31
      %s112 = sor.u32 %s110, %s111
      %p113 = scmp.eq.s32.totalorder %s112, 0
      %s115 = sadd.s32 %s114, 1
      %s116 = scalar_select %p113, %s114, %s115
      %p119 = pneg %p113
      %p120 = scmp.eq.s32.totalorder %s12, 1
      %p121 = por %p119, %p120
      %p122 = scmp.ne.s32.totalorder %s114, %s117
      %p123 = scmp.eq.s32.totalorder %s12, 0
      %p124 = por %p122, %p123
      %p125 = scmp.ne.s32.totalorder %s114, %s117
      %p126 = scmp.eq.s32.totalorder %s17, 1
      %p127 = por %p125, %p126
      %p128 = scmp.ne.s32.totalorder %s117, %s118
      %p129 = scmp.eq.s32.totalorder %s17, 0
      %p130 = por %p128, %p129
      %p131 = scmp.ne.s32.totalorder %s117, %s118
      %p132 = scmp.eq.s32.totalorder %s18, 1
      %p133 = por %p131, %p132
      %p135 = scmp.ne.s32.totalorder %s118, %s134
      %p136 = scmp.eq.s32.totalorder %s18, 0
      %p137 = por %p135, %p136
      %p138 = scmp.le.s32.totalorder 1, %s12
      %p139 = scmp.lt.s32.totalorder %s12, 3
      %p140 = pnand %p138, %p139
      %p141 = pneg %p140
      // Predicated region
      $region9: #{tpu_custom_call.1} parent=5 // pred_check
        _
      $region10: #{tpu_custom_call.1} parent=5 // pred_check_branch
        %143 = sbr.rel (%p140) target = $region12
      $region11: #{tpu_custom_call.1} parent=5 // pred_region
        %s144 = ssub.s32 %s12, 1
        // Predicated region
        $region13: #{tpu_custom_call.1} parent=11 // pred_check
          %p145 = pneg %p76
        $region14: #{tpu_custom_call.1} parent=11 // pred_check_branch
          %147 = sbr.rel (%p145) target = $region16
        $region15: #{tpu_custom_call.1} parent=11 // pred_region
          %p148 = scmp.lt.s32.totalorder %s21, 0
          %s149 = scalar_select %p148, %s21, 0
          %s150 = smul.addr %s149, 4
          %s151 = scalar_lea.vmem %s1, %s150
        $region16: #{tpu_custom_call.1} parent=11 // pred_fallthru
          _
        // Predicated region
        $region17: #{tpu_custom_call.1} parent=11 // pred_check
          %p152 = pneg %p102
        $region18: #{tpu_custom_call.1} parent=11 // pred_check_branch
          %154 = sbr.rel (%p152) target = $region20
        $region19: #{tpu_custom_call.1} parent=11 // pred_region
          %p155 = scmp.lt.s32.totalorder %s21, 0
          %s156 = scalar_select %p155, %s21, 0
          %s157 = scalar_lea.vmem %s2, %s156
        $region20: #{tpu_custom_call.1} parent=11 // pred_fallthru
          _
      $region12: #{tpu_custom_call.1} parent=5 // pred_fallthru
        _
      %p158 = scmp.lt.s32.totalorder %s12, 2
      // Predicated region
      $region21: #{tpu_custom_call.1} parent=5 // pred_check
        %p159 = pneg %p158
      $region22: #{tpu_custom_call.1} parent=5 // pred_check_branch
        %161 = sbr.rel (%p159) target = $region24
      $region23: #{tpu_custom_call.1} parent=5 // pred_region
        // Predicated region
        $region25: #{tpu_custom_call.1} parent=23 // pred_check
          %p162 = pneg %p44
        $region26: #{tpu_custom_call.1} parent=23 // pred_check_branch
          %164 = sbr.rel (%p162) target = $region28
        $region27: #{tpu_custom_call.1} parent=23 // pred_region
          %s165 = smul.u32 2, %s20
          %p166 = scmp.lt.s32.totalorder %s165, 3
          %s167 = scalar_select %p166, %s165, 3
          %s168 = smul.addr %s167, 15
          %s169 = smul.addr %s168, 4
          %s170 = scalar_lea.vmem %s0, %s169
          %s171 = smul.u32 2, %s20
        $region28: #{tpu_custom_call.1} parent=23 // pred_fallthru
          _
      $region24: #{tpu_custom_call.1} parent=5 // pred_fallthru
        _
      %p172 = scmp.le.s32.totalorder 1, %s12
      %p173 = scmp.lt.s32.totalorder %s12, 3
      %p174 = pnand %p172, %p173
      %p175 = pneg %p174
      // Predicated region
      $region29: #{tpu_custom_call.1} parent=5 // pred_check
        _
      $region30: #{tpu_custom_call.1} parent=5 // pred_check_branch
        %177 = sbr.rel (%p174) target = $region32
      $region31: #{tpu_custom_call.1} parent=5 // pred_region
        %s178 = ssub.s32 %s12, 1
        %s179 = smul.u32 2, %s22
        %p180 = scmp.lt.s32.totalorder %s179, 3
        %s181 = scalar_select %p180, %s179, 3
        %s182 = smul.addr %s181, 15
        %s183 = smul.addr %s182, 4
        %s184 = scalar_lea.vmem %s0, %s183
        %p185 = pneg %p50
        %p186 = pneg %p47
        %p187 = scmp.lt.s32.totalorder %s21, 0
        %s188 = scalar_select %p187, %s21, 0
        %s189 = smul.addr %s188, 4
        %s190 = scalar_lea.vmem %s1, %s189
        %p191 = pneg %p76
        %p192 = pneg %p73
        %p193 = scmp.lt.s32.totalorder %s21, 0
        %s194 = scalar_select %p193, %s21, 0
        %s195 = scalar_lea.vmem %s2, %s194
        %p196 = pneg %p102
        %p197 = pneg %p99
        %p198 = pneg %p130
        %p199 = pneg %p127
        %s200 = sand.u32 %s117, 1
        %s201 = scalar_lea.sflag [#allocation3], %s200
        %s202 = sand.u32 %s117, 1
        %s203 = smul.addr %s202, 32
        %s204 = scalar_lea.vmem [#allocation2], %s203
        %s205 = smul.u32 2, %s22
        %p206 = scmp.lt.s32.totalorder %s205, 3
        %s207 = scalar_select %p206, %s205, 3
        %s208 = smul.addr %s207, 15
        %s209 = smul.addr %s208, 4
        %s210 = scalar_lea.vmem %s0, %s209
        %s211 = smul.u32 2, %s22
        %p212 = scmp.lt.s32.totalorder %s21, 0
        %s213 = scalar_select %p212, %s21, 0
        %s214 = smul.addr %s213, 4
        %s215 = scalar_lea.vmem %s1, %s214
        %p216 = scmp.lt.s32.totalorder %s21, 0
        %s217 = scalar_select %p216, %s21, 0
        %s218 = scalar_lea.vmem %s2, %s217
        %s219 = smul.u32 2, %s22
        %v220 = vld [vmem:[%s210] sm:$0xf]
        %v221 = vld [vmem:[%s210 + $0x4] sm:$0xf]
        %v222 = vld [vmem:[%s210 + $0x8] sm:$0xf]
        %v223 = vld [vmem:[%s210 + $0xc] sm:$0xf]
        %v224 = vld [vmem:[%s210 + $0x3c] sm:$0xf]
        %v225 = vld [vmem:[%s210 + $0x40] sm:$0xf]
        %v226 = vld [vmem:[%s210 + $0x44] sm:$0xf]
        %v227 = vld [vmem:[%s210 + $0x48] sm:$0xf]
        %v228 = vunpack.c.l.bf16 %v220
        %v229 = vunpack.c.l.bf16 %v221
        %v230 = vunpack.c.l.bf16 %v222
        %v231 = vunpack.c.l.bf16 %v223
        %v232 = vunpack.c.l.bf16 %v224
        %v233 = vunpack.c.l.bf16 %v225
        %v234 = vunpack.c.l.bf16 %v226
        %v235 = vunpack.c.l.bf16 %v227
        %v236 = vld [vmem:[%s215] sm:$0x1]
        %v237 = vunpack.c.l.bf16 %v236
        %239 = vset.pattern.permute.xlu0 0
        %240 = vperm.xlu0 %239, %v228
        %v241 = vpop.permute.xlu0 %240
        %244 = vset.pattern.permute.xlu0 0
        %245 = vperm.xlu0 %244, %v229
        %v246 = vpop.permute.xlu0 %245
        %249 = vset.pattern.permute.xlu0 0
        %250 = vperm.xlu0 %249, %v230
        %v251 = vpop.permute.xlu0 %250
        %254 = vset.pattern.permute.xlu0 0
        %255 = vperm.xlu0 %254, %v231
        %v256 = vpop.permute.xlu0 %255
        %259 = vset.pattern.permute.xlu0 0
        %260 = vperm.xlu0 %259, %v232
        %v261 = vpop.permute.xlu0 %260
        %264 = vset.pattern.permute.xlu0 0
        %265 = vperm.xlu0 %264, %v233
        %v266 = vpop.permute.xlu0 %265
        %269 = vset.pattern.permute.xlu0 0
        %270 = vperm.xlu0 %269, %v234
        %v271 = vpop.permute.xlu0 %270
        %274 = vset.pattern.permute.xlu0 0
        %275 = vperm.xlu0 %274, %v235
        %v276 = vpop.permute.xlu0 %275
        %v278 = vperm.slane %v237, 0
        %v279 = vmul.f32 %v241, %v278
        %v280 = vmul.f32 %v246, %v278
        %v281 = vmul.f32 %v251, %v278
        %v282 = vmul.f32 %v256, %v278
        %v283 = vmul.f32 %v261, %v278
        %v284 = vmul.f32 %v266, %v278
        %v285 = vmul.f32 %v271, %v278
        %v286 = vmul.f32 %v276, %v278
        %s287 = scalar_lea.vmem %s210, 20
        %v288 = vld [vmem:[%s287] sm:$0xf]
        %v289 = vld [vmem:[%s287 + $0x4] sm:$0xf]
        %v290 = vld [vmem:[%s287 + $0x8] sm:$0xf]
        %v291 = vld [vmem:[%s287 + $0xc] sm:$0xf]
        %v292 = vld [vmem:[%s287 + $0x3c] sm:$0xf]
        %v293 = vld [vmem:[%s287 + $0x40] sm:$0xf]
        %v294 = vld [vmem:[%s287 + $0x44] sm:$0xf]
        %v295 = vld [vmem:[%s287 + $0x48] sm:$0xf]
        %v296 = vunpack.c.l.bf16 %v288
        %v297 = vunpack.c.l.bf16 %v289
        %v298 = vunpack.c.l.bf16 %v290
        %v299 = vunpack.c.l.bf16 %v291
        %v300 = vunpack.c.l.bf16 %v292
        %v301 = vunpack.c.l.bf16 %v293
        %v302 = vunpack.c.l.bf16 %v294
        %v303 = vunpack.c.l.bf16 %v295
        %305 = vset.pattern.permute.xlu0 0
        %306 = vperm.xlu0 %305, %v296
        %v307 = vpop.permute.xlu0 %306
        %310 = vset.pattern.permute.xlu0 0
        %311 = vperm.xlu0 %310, %v297
        %v312 = vpop.permute.xlu0 %311
        %315 = vset.pattern.permute.xlu0 0
        %316 = vperm.xlu0 %315, %v298
        %v317 = vpop.permute.xlu0 %316
        %320 = vset.pattern.permute.xlu0 0
        %321 = vperm.xlu0 %320, %v299
        %v322 = vpop.permute.xlu0 %321
        %325 = vset.pattern.permute.xlu0 0
        %326 = vperm.xlu0 %325, %v300
        %v327 = vpop.permute.xlu0 %326
        %330 = vset.pattern.permute.xlu0 0
        %331 = vperm.xlu0 %330, %v301
        %v332 = vpop.permute.xlu0 %331
        %335 = vset.pattern.permute.xlu0 0
        %336 = vperm.xlu0 %335, %v302
        %v337 = vpop.permute.xlu0 %336
        %340 = vset.pattern.permute.xlu0 0
        %341 = vperm.xlu0 %340, %v303
        %v342 = vpop.permute.xlu0 %341
        %v344 = vperm.slane %v237, 1
        %v345 = vmul.f32 %v307, %v344
        %v346 = vmul.f32 %v312, %v344
        %v347 = vmul.f32 %v317, %v344
        %v348 = vmul.f32 %v322, %v344
        %v349 = vmul.f32 %v327, %v344
        %v350 = vmul.f32 %v332, %v344
        %v351 = vmul.f32 %v337, %v344
        %v352 = vmul.f32 %v342, %v344
        %v353 = vadd.f32 %v279, %v345
        %v354 = vadd.f32 %v280, %v346
        %v355 = vadd.f32 %v281, %v347
        %v356 = vadd.f32 %v282, %v348
        %v357 = vadd.f32 %v283, %v349
        %v358 = vadd.f32 %v284, %v350
        %v359 = vadd.f32 %v285, %v351
        %v360 = vadd.f32 %v286, %v352
        %s361 = scalar_lea.vmem %s210, 40
        %v362 = vld [vmem:[%s361] sm:$0xf]
        %v363 = vld [vmem:[%s361 + $0x4] sm:$0xf]
        %v364 = vld [vmem:[%s361 + $0x8] sm:$0xf]
        %v365 = vld [vmem:[%s361 + $0xc] sm:$0xf]
        %v366 = vld [vmem:[%s361 + $0x3c] sm:$0xf]
        %v367 = vld [vmem:[%s361 + $0x40] sm:$0xf]
        %v368 = vld [vmem:[%s361 + $0x44] sm:$0xf]
        %v369 = vld [vmem:[%s361 + $0x48] sm:$0xf]
        %v370 = vunpack.c.l.bf16 %v362
        %v371 = vunpack.c.l.bf16 %v363
        %v372 = vunpack.c.l.bf16 %v364
        %v373 = vunpack.c.l.bf16 %v365
        %v374 = vunpack.c.l.bf16 %v366
        %v375 = vunpack.c.l.bf16 %v367
        %v376 = vunpack.c.l.bf16 %v368
        %v377 = vunpack.c.l.bf16 %v369
        %v378 = vld [vmem:[%s215] sm:$0x2]
        %v379 = vunpack.c.l.bf16 %v378
        %381 = vset.pattern.permute.xlu0 0
        %382 = vperm.xlu0 %381, %v370
        %v383 = vpop.permute.xlu0 %382
        %386 = vset.pattern.permute.xlu0 0
        %387 = vperm.xlu0 %386, %v371
        %v388 = vpop.permute.xlu0 %387
        %391 = vset.pattern.permute.xlu0 0
        %392 = vperm.xlu0 %391, %v372
        %v393 = vpop.permute.xlu0 %392
        %396 = vset.pattern.permute.xlu0 0
        %397 = vperm.xlu0 %396, %v373
        %v398 = vpop.permute.xlu0 %397
        %401 = vset.pattern.permute.xlu0 0
        %402 = vperm.xlu0 %401, %v374
        %v403 = vpop.permute.xlu0 %402
        %406 = vset.pattern.permute.xlu0 0
        %407 = vperm.xlu0 %406, %v375
        %v408 = vpop.permute.xlu0 %407
        %411 = vset.pattern.permute.xlu0 0
        %412 = vperm.xlu0 %411, %v376
        %v413 = vpop.permute.xlu0 %412
        %416 = vset.pattern.permute.xlu0 0
        %417 = vperm.xlu0 %416, %v377
        %v418 = vpop.permute.xlu0 %417
        %v420 = vperm.slane %v379, 2
        %v421 = vmul.f32 %v383, %v420
        %v422 = vmul.f32 %v388, %v420
        %v423 = vmul.f32 %v393, %v420
        %v424 = vmul.f32 %v398, %v420
        %v425 = vmul.f32 %v403, %v420
        %v426 = vmul.f32 %v408, %v420
        %v427 = vmul.f32 %v413, %v420
        %v428 = vmul.f32 %v418, %v420
        %v429 = vadd.f32 %v353, %v421
        %v430 = vadd.f32 %v354, %v422
        %v431 = vadd.f32 %v355, %v423
        %v432 = vadd.f32 %v356, %v424
        %v433 = vadd.f32 %v357, %v425
        %v434 = vadd.f32 %v358, %v426
        %v435 = vadd.f32 %v359, %v427
        %v436 = vadd.f32 %v360, %v428
        %v437 = vld [vmem:[%s210] sm:$0xf]
        %v438 = vld [vmem:[%s210 + $0x4] sm:$0xf]
        %v439 = vld [vmem:[%s210 + $0x8] sm:$0xf]
        %v440 = vld [vmem:[%s210 + $0xc] sm:$0xf]
        %v441 = vld [vmem:[%s210 + $0x10] sm:$0x1]
        %v442 = vld [vmem:[%s210 + $0x3c] sm:$0xf]
        %v443 = vld [vmem:[%s210 + $0x40] sm:$0xf]
        %v444 = vld [vmem:[%s210 + $0x44] sm:$0xf]
        %v445 = vld [vmem:[%s210 + $0x48] sm:$0xf]
        %v446 = vld [vmem:[%s210 + $0x4c] sm:$0x1]
        %vm447 = vsmask.f32 3328
        %vm448 = vsmask.f32 7440
        %vm449 = vmor %vm447, %vm448
        %v451 = vshrl.u32 %v437, 16
        %v453 = vrot.slane %v451, 4
        %v454 = vshll.u32 %v437, 16
        %v456 = vrot.slane %v454, 5
        %v457 = vor.u32 %v453, %v456
        %v458 = vrot.slane %v457, 4
        %v460 = vshll.u32 %v438, 16
        %v462 = vrot.slane %v460, 5
        %v463 = vsel %vm449, %v458, %v462
        %v464 = vshrl.u32 %v438, 16
        %v466 = vrot.slane %v464, 4
        %v467 = vor.u32 %v466, %v462
        %v468 = vrot.slane %v467, 4
        %v470 = vshll.u32 %v439, 16
        %v472 = vrot.slane %v470, 5
        %v473 = vsel %vm449, %v468, %v472
        %v474 = vshrl.u32 %v439, 16
        %v476 = vrot.slane %v474, 4
        %v477 = vor.u32 %v476, %v472
        %v478 = vrot.slane %v477, 4
        %v480 = vshll.u32 %v440, 16
        %v482 = vrot.slane %v480, 5
        %v483 = vsel %vm449, %v478, %v482
        %v484 = vshrl.u32 %v440, 16
        %v486 = vrot.slane %v484, 4
        %v487 = vor.u32 %v486, %v482
        %v488 = vrot.slane %v487, 4
        %v490 = vshll.u32 %v441, 16
        %v492 = vrot.slane %v490, 5
        %v493 = vsel %vm449, %v488, %v492
        %v495 = vshrl.u32 %v442, 16
        %v497 = vrot.slane %v495, 4
        %v498 = vshll.u32 %v442, 16
        %v500 = vrot.slane %v498, 5
        %v501 = vor.u32 %v497, %v500
        %v502 = vrot.slane %v501, 4
        %v504 = vshll.u32 %v443, 16
        %v506 = vrot.slane %v504, 5
        %v507 = vsel %vm449, %v502, %v506
        %v508 = vshrl.u32 %v443, 16
        %v510 = vrot.slane %v508, 4
        %v511 = vor.u32 %v510, %v506
        %v512 = vrot.slane %v511, 4
        %v514 = vshll.u32 %v444, 16
        %v516 = vrot.slane %v514, 5
        %v517 = vsel %vm449, %v512, %v516
        %v518 = vshrl.u32 %v444, 16
        %v520 = vrot.slane %v518, 4
        %v521 = vor.u32 %v520, %v516
        %v522 = vrot.slane %v521, 4
        %v524 = vshll.u32 %v445, 16
        %v526 = vrot.slane %v524, 5
        %v527 = vsel %vm449, %v522, %v526
        %v528 = vshrl.u32 %v445, 16
        %v530 = vrot.slane %v528, 4
        %v531 = vor.u32 %v530, %v526
        %v532 = vrot.slane %v531, 4
        %v534 = vshll.u32 %v446, 16
        %v536 = vrot.slane %v534, 5
        %v537 = vsel %vm449, %v532, %v536
        %v546 = vunpack.c.l.bf16 %v463
        %v547 = vunpack.c.l.bf16 %v473
        %v548 = vunpack.c.l.bf16 %v483
        %v549 = vunpack.c.l.bf16 %v493
        %v550 = vunpack.c.l.bf16 %v507
        %v551 = vunpack.c.l.bf16 %v517
        %v552 = vunpack.c.l.bf16 %v527
        %v553 = vunpack.c.l.bf16 %v537
        %555 = vset.pattern.permute.xlu0 0
        %556 = vperm.xlu0 %555, %v546
        %v557 = vpop.permute.xlu0 %556
        %560 = vset.pattern.permute.xlu0 0
        %561 = vperm.xlu0 %560, %v547
        %v562 = vpop.permute.xlu0 %561
        %565 = vset.pattern.permute.xlu0 0
        %566 = vperm.xlu0 %565, %v548
        %v567 = vpop.permute.xlu0 %566
        %570 = vset.pattern.permute.xlu0 0
        %571 = vperm.xlu0 %570, %v549
        %v572 = vpop.permute.xlu0 %571
        %575 = vset.pattern.permute.xlu0 0
        %576 = vperm.xlu0 %575, %v550
        %v577 = vpop.permute.xlu0 %576
        %580 = vset.pattern.permute.xlu0 0
        %581 = vperm.xlu0 %580, %v551
        %v582 = vpop.permute.xlu0 %581
        %585 = vset.pattern.permute.xlu0 0
        %586 = vperm.xlu0 %585, %v552
        %v587 = vpop.permute.xlu0 %586
        %590 = vset.pattern.permute.xlu0 0
        %591 = vperm.xlu0 %590, %v553
        %v592 = vpop.permute.xlu0 %591
        %v594 = vperm.slane %v379, 3
        %v595 = vmul.f32 %v557, %v594
        %v596 = vmul.f32 %v562, %v594
        %v597 = vmul.f32 %v567, %v594
        %v598 = vmul.f32 %v572, %v594
        %v599 = vmul.f32 %v577, %v594
        %v600 = vmul.f32 %v582, %v594
        %v601 = vmul.f32 %v587, %v594
        %v602 = vmul.f32 %v592, %v594
        %v603 = vadd.f32 %v429, %v595
        %v604 = vadd.f32 %v430, %v596
        %v605 = vadd.f32 %v431, %v597
        %v606 = vadd.f32 %v432, %v598
        %v607 = vadd.f32 %v433, %v599
        %v608 = vadd.f32 %v434, %v600
        %v609 = vadd.f32 %v435, %v601
        %v610 = vadd.f32 %v436, %v602
        %v611 = vld [vmem:[%s287] sm:$0xf]
        %v612 = vld [vmem:[%s287 + $0x4] sm:$0xf]
        %v613 = vld [vmem:[%s287 + $0x8] sm:$0xf]
        %v614 = vld [vmem:[%s287 + $0xc] sm:$0xf]
        %v615 = vld [vmem:[%s287 + $0x10] sm:$0x1]
        %v616 = vld [vmem:[%s287 + $0x3c] sm:$0xf]
        %v617 = vld [vmem:[%s287 + $0x40] sm:$0xf]
        %v618 = vld [vmem:[%s287 + $0x44] sm:$0xf]
        %v619 = vld [vmem:[%s287 + $0x48] sm:$0xf]
        %v620 = vld [vmem:[%s287 + $0x4c] sm:$0x1]
        %v622 = vshrl.u32 %v611, 16
        %v624 = vrot.slane %v622, 4
        %v625 = vshll.u32 %v611, 16
        %v627 = vrot.slane %v625, 5
        %v628 = vor.u32 %v624, %v627
        %v629 = vrot.slane %v628, 4
        %v631 = vshll.u32 %v612, 16
        %v633 = vrot.slane %v631, 5
        %v634 = vsel %vm449, %v629, %v633
        %v635 = vshrl.u32 %v612, 16
        %v637 = vrot.slane %v635, 4
        %v638 = vor.u32 %v637, %v633
        %v639 = vrot.slane %v638, 4
        %v641 = vshll.u32 %v613, 16
        %v643 = vrot.slane %v641, 5
        %v644 = vsel %vm449, %v639, %v643
        %v645 = vshrl.u32 %v613, 16
        %v647 = vrot.slane %v645, 4
        %v648 = vor.u32 %v647, %v643
        %v649 = vrot.slane %v648, 4
        %v651 = vshll.u32 %v614, 16
        %v653 = vrot.slane %v651, 5
        %v654 = vsel %vm449, %v649, %v653
        %v655 = vshrl.u32 %v614, 16
        %v657 = vrot.slane %v655, 4
        %v658 = vor.u32 %v657, %v653
        %v659 = vrot.slane %v658, 4
        %v661 = vshll.u32 %v615, 16
        %v663 = vrot.slane %v661, 5
        %v664 = vsel %vm449, %v659, %v663
        %v666 = vshrl.u32 %v616, 16
        %v668 = vrot.slane %v666, 4
        %v669 = vshll.u32 %v616, 16
        %v671 = vrot.slane %v669, 5
        %v672 = vor.u32 %v668, %v671
        %v673 = vrot.slane %v672, 4
        %v675 = vshll.u32 %v617, 16
        %v677 = vrot.slane %v675, 5
        %v678 = vsel %vm449, %v673, %v677
        %v679 = vshrl.u32 %v617, 16
        %v681 = vrot.slane %v679, 4
        %v682 = vor.u32 %v681, %v677
        %v683 = vrot.slane %v682, 4
        %v685 = vshll.u32 %v618, 16
        %v687 = vrot.slane %v685, 5
        %v688 = vsel %vm449, %v683, %v687
        %v689 = vshrl.u32 %v618, 16
        %v691 = vrot.slane %v689, 4
        %v692 = vor.u32 %v691, %v687
        %v693 = vrot.slane %v692, 4
        %v695 = vshll.u32 %v619, 16
        %v697 = vrot.slane %v695, 5
        %v698 = vsel %vm449, %v693, %v697
        %v699 = vshrl.u32 %v619, 16
        %v701 = vrot.slane %v699, 4
        %v702 = vor.u32 %v701, %v697
        %v703 = vrot.slane %v702, 4
        %v705 = vshll.u32 %v620, 16
        %v707 = vrot.slane %v705, 5
        %v708 = vsel %vm449, %v703, %v707
        %v717 = vunpack.c.l.bf16 %v634
        %v718 = vunpack.c.l.bf16 %v644
        %v719 = vunpack.c.l.bf16 %v654
        %v720 = vunpack.c.l.bf16 %v664
        %v721 = vunpack.c.l.bf16 %v678
        %v722 = vunpack.c.l.bf16 %v688
        %v723 = vunpack.c.l.bf16 %v698
        %v724 = vunpack.c.l.bf16 %v708
        %v725 = vld [vmem:[%s215] sm:$0x4]
        %v726 = vunpack.c.l.bf16 %v725
        %728 = vset.pattern.permute.xlu0 0
        %729 = vperm.xlu0 %728, %v717
        %v730 = vpop.permute.xlu0 %729
        %733 = vset.pattern.permute.xlu0 0
        %734 = vperm.xlu0 %733, %v718
        %v735 = vpop.permute.xlu0 %734
        %738 = vset.pattern.permute.xlu0 0
        %739 = vperm.xlu0 %738, %v719
        %v740 = vpop.permute.xlu0 %739
        %743 = vset.pattern.permute.xlu0 0
        %744 = vperm.xlu0 %743, %v720
        %v745 = vpop.permute.xlu0 %744
        %748 = vset.pattern.permute.xlu0 0
        %749 = vperm.xlu0 %748, %v721
        %v750 = vpop.permute.xlu0 %749
        %753 = vset.pattern.permute.xlu0 0
        %754 = vperm.xlu0 %753, %v722
        %v755 = vpop.permute.xlu0 %754
        %758 = vset.pattern.permute.xlu0 0
        %759 = vperm.xlu0 %758, %v723
        %v760 = vpop.permute.xlu0 %759
        %763 = vset.pattern.permute.xlu0 0
        %764 = vperm.xlu0 %763, %v724
        %v765 = vpop.permute.xlu0 %764
        %v767 = vperm.slane %v726, 4
        %v768 = vmul.f32 %v730, %v767
        %v769 = vmul.f32 %v735, %v767
        %v770 = vmul.f32 %v740, %v767
        %v771 = vmul.f32 %v745, %v767
        %v772 = vmul.f32 %v750, %v767
        %v773 = vmul.f32 %v755, %v767
        %v774 = vmul.f32 %v760, %v767
        %v775 = vmul.f32 %v765, %v767
        %v776 = vadd.f32 %v603, %v768
        %v777 = vadd.f32 %v604, %v769
        %v778 = vadd.f32 %v605, %v770
        %v779 = vadd.f32 %v606, %v771
        %v780 = vadd.f32 %v607, %v772
        %v781 = vadd.f32 %v608, %v773
        %v782 = vadd.f32 %v609, %v774
        %v783 = vadd.f32 %v610, %v775
        %v784 = vld [vmem:[%s218] sm:$0x1]
        %v786 = vperm.slane %v784, 0
        %v788 = vadd.f32 %v776, %v786
        %v789 = vadd.f32 %v777, %v786
        %v790 = vadd.f32 %v778, %v786
        %v791 = vadd.f32 %v779, %v786
        %v792 = vadd.f32 %v780, %v786
        %v793 = vadd.f32 %v781, %v786
        %v794 = vadd.f32 %v782, %v786
        %v795 = vadd.f32 %v783, %v786
        %vm796 = vcmp.ge.f32.partialorder %v788, 0.0
        %vm797 = vcmp.ge.f32.partialorder %v789, 0.0
        %vm798 = vcmp.ge.f32.partialorder %v790, 0.0
        %vm799 = vcmp.ge.f32.partialorder %v791, 0.0
        %vm800 = vcmp.ge.f32.partialorder %v792, 0.0
        %vm801 = vcmp.ge.f32.partialorder %v793, 0.0
        %vm802 = vcmp.ge.f32.partialorder %v794, 0.0
        %vm803 = vcmp.ge.f32.partialorder %v795, 0.0
        %v804 = vmul.f32 %v788, 0.1
        %v805 = vmul.f32 %v789, 0.1
        %v806 = vmul.f32 %v790, 0.1
        %v807 = vmul.f32 %v791, 0.1
        %v808 = vmul.f32 %v792, 0.1
        %v809 = vmul.f32 %v793, 0.1
        %v810 = vmul.f32 %v794, 0.1
        %v811 = vmul.f32 %v795, 0.1
        %v812 = vsel %vm796, %v788, %v804
        %v813 = vsel %vm797, %v789, %v805
        %v814 = vsel %vm798, %v790, %v806
        %v815 = vsel %vm799, %v791, %v807
        %v816 = vsel %vm800, %v792, %v808
        %v817 = vsel %vm801, %v793, %v809
        %v818 = vsel %vm802, %v794, %v810
        %v819 = vsel %vm803, %v795, %v811
        %v820 = vpack.c.bf16 %v812, %v812
        %v821 = vpack.c.bf16 %v813, %v813
        %v822 = vpack.c.bf16 %v814, %v814
        %v823 = vpack.c.bf16 %v815, %v815
        %v824 = vpack.c.bf16 %v816, %v816
        %v825 = vpack.c.bf16 %v817, %v817
        %v826 = vpack.c.bf16 %v818, %v818
        %v827 = vpack.c.bf16 %v819, %v819
        %vm828 = vcmask 257024
        %829 = vst.msk [vmem:[%s204] sm:$0xf] %vm828, %v820
        %830 = vst.msk [vmem:[%s204 + $0x4] sm:$0xf] %vm828, %v821
        %831 = vst.msk [vmem:[%s204 + $0x8] sm:$0xf] %vm828, %v822
        %832 = vst.msk [vmem:[%s204 + $0xc] sm:$0xf] %vm828, %v823
        %833 = vst.msk [vmem:[%s204 + $0x10] sm:$0xf] %vm828, %v824
        %834 = vst.msk [vmem:[%s204 + $0x14] sm:$0xf] %vm828, %v825
        %835 = vst.msk [vmem:[%s204 + $0x18] sm:$0xf] %vm828, %v826
        %836 = vst.msk [vmem:[%s204 + $0x1c] sm:$0xf] %vm828, %v827
        %s837 = sand.u32 %s117, 1
        %s838 = scalar_lea.sflag [#allocation3], %s837
        %s839 = sand.u32 %s117, 1
        %s840 = smul.addr %s839, 32
        %s841 = scalar_lea.vmem [#allocation2], %s840
        // Predicated region
        $region33: #{tpu_custom_call.1} parent=31 // pred_check
          %p842 = pneg %p127
        $region34: #{tpu_custom_call.1} parent=31 // pred_check_branch
          %844 = sbr.rel (%p842) target = $region36
        $region35: #{tpu_custom_call.1} parent=31 // pred_region
          %s845 = smul.u32 2, %s22
          %847 = vsyncadd %s838, 0
          %s848 = smul.addr %s845, 4
          %s849 = sadd.s32 %s21, %s848
          %s850 = smul.addr %s849, 4
          %s851 = scalar_lea.hbm %s3, %s850
          %s852 = sshll.u32 %s841, 4
          %s853 = int_to_ptr.vmem [resolvable:$true] %s852
          %s854 = sshll.u32 %s851, 4
          %s855 = int_to_ptr.hbm [resolvable:$true] %s854
          %860 = dma.vmem_to_hbm [thread:$0]  %s853, 512, %s855, %s838, 64, 64, 4
        $region36: #{tpu_custom_call.1} parent=31 // pred_fallthru
          _
      $region32: #{tpu_custom_call.1} parent=5 // pred_fallthru
        _
      %p861 = scmp.le.s32.totalorder 2, %s12
      // Predicated region
      $region37: #{tpu_custom_call.1} parent=5 // pred_check
        %p862 = pneg %p861
      $region38: #{tpu_custom_call.1} parent=5 // pred_check_branch
        %864 = sbr.rel (%p862) target = $region40
      $region39: #{tpu_custom_call.1} parent=5 // pred_region
        %s865 = ssub.s32 %s12, 2
        // Predicated region
        $region41: #{tpu_custom_call.1} parent=39 // pred_check
          %p866 = pneg %p133
        $region42: #{tpu_custom_call.1} parent=39 // pred_check_branch
          %868 = sbr.rel (%p866) target = $region44
        $region43: #{tpu_custom_call.1} parent=39 // pred_region
          %s869 = sand.u32 %s118, 1
          %s870 = scalar_lea.sflag [#allocation3], %s869
          %s871 = sand.u32 %s118, 1
          %s872 = smul.addr %s871, 32
          %s873 = scalar_lea.vmem [#allocation2], %s872
          %875 = dma.done %s870, 512
        $region44: #{tpu_custom_call.1} parent=39 // pred_fallthru
          _
      $region40: #{tpu_custom_call.1} parent=5 // pred_fallthru
        _
    $region6: #{tpu_custom_call.1} parent=1 // loop_footer
      %s16 = sadd.s32 1, %s12
    $region7: #{tpu_custom_call.1} parent=1 // loop_footer_branch
      %11 = sbr.rel target = $region3
    $region8: #{tpu_custom_call.1} parent=1 // loop_exit
      _
    %876 = vsyncpa [#allocation3], 1
    %s877 = scalar_lea.sflag [#allocation3], 1
    %878 = vsyncpa %s877, 1

// kernel: tpu_custom_call.1
$region0: #{tpu_custom_call.1}
  #allocation0 [shape = 'u32[]', space=smem, size = 0x4, offset = 0x4, fixed_abs, tag = 'smem constant byte address 0x4 - core index']
  #allocation1 [shape = 'u32[72,128]{1,0:T(1,128)}', space=vmem, size = 0x9000, scoped, tag = 'internal scratch']
  %s0 = inlined_call_operand.vmem [shape: bf16[4,3,33,1], index: 0, kind: input, shape index: {}]
  %s1 = inlined_call_operand.vmem [shape: bf16[5,32], index: 1, kind: input, shape index: {}]
  %s2 = inlined_call_operand.vmem [shape: f32[1,32], index: 2, kind: input, shape index: {}]
  %s3 = inlined_call_operand.hbm [shape: bf16[4,32,32], index: 3, kind: output, shape index: {}]
  %s4 = sld [smem:[#allocation0]]
  $region45: #{tpu_custom_call.1} parent=0
    _
  %s6 = ssub.s32 1, %s4
  %s7 = scalar_select 0, %s6, %s4
  $region1: #{tpu_custom_call.1} parent=0
    #allocation2 [shape = 'u8[32768]{0}', space=vmem, size = 0x8000, scoped, tag = 'output window, operand 0']
    #allocation3 [shape = 's32[2]{0}', space=sflag, size = 0x8, scoped, tag = 'scoped memory for tpu_custom_call.1']
    %8 = vsyncpa [#allocation3], 0
    %s9 = scalar_lea.sflag [#allocation3], 1
    %10 = vsyncpa %s9, 0
    loop: start=0, step=1, limit=4
    $region2: #{tpu_custom_call.1} parent=1 // loop_pre_header
      _
    $region3: #{tpu_custom_call.1} parent=1 // loop_header
      %s12 = sphi 0, %s16
      %p13 = scmp.ge.s32.totalorder %s12, 4
      %s19 = sphi 0, %s31
      %s20 = sphi 0, %s27
      %s21 = sphi 0, %s19
      %s22 = sphi 0, %s20
      %s23 = sphi 0, %s21
      %s24 = sphi 0, %s22
      %s34 = sphi 0, %s36
      %s37 = sphi 0, %s34
      %s38 = sphi 0, %s37
      %s54 = sphi 0, %s38
      %s60 = sphi 0, %s62
      %s63 = sphi 0, %s60
      %s64 = sphi 0, %s63
      %s80 = sphi 0, %s64
      %s86 = sphi 0, %s88
      %s89 = sphi 0, %s86
      %s90 = sphi 0, %s89
      %s106 = sphi 0, %s90
      %s114 = sphi 0, %s116
      %s117 = sphi 0, %s114
      %s118 = sphi 0, %s117
      %s134 = sphi 0, %s118
    $region4: #{tpu_custom_call.1} parent=1 // loop_header_branch
      %15 = sbr.rel (%p13) target = $region8
    $region5: #{tpu_custom_call.1} parent=1 // loop_body
      %s17 = ssub.s32 %s12, 1
      %s18 = ssub.s32 %s12, 2
      %s25 = sadd.s32 1, %s20
      %p26 = scmp.ge.s32.totalorder %s25, 2
      %s27 = scalar_select %p26, 0, %s25
      %s28 = sadd.s32 1, %s19
      %s29 = scalar_select %p26, %s28, %s19
      %p30 = scmp.ge.s32.totalorder %s29, 1
      %s31 = scalar_select %p30, 0, %s29
      %s32 = ssub.s32 %s20, %s27
      %p33 = scmp.eq.s32.totalorder %s32, 0
      %s35 = sadd.s32 %s34, 1
      %s36 = scalar_select %p33, %s34, %s35
      %p39 = pneg %p33
      %p40 = scmp.eq.s32.totalorder %s12, 1
      %p41 = por %p39, %p40
      %p42 = scmp.ne.s32.totalorder %s34, %s37
      %p43 = scmp.eq.s32.totalorder %s12, 0
      %p44 = por %p42, %p43
      %p45 = scmp.ne.s32.totalorder %s34, %s37
      %p46 = scmp.eq.s32.totalorder %s17, 1
      %p47 = por %p45, %p46
      %p48 = scmp.ne.s32.totalorder %s37, %s38
      %p49 = scmp.eq.s32.totalorder %s17, 0
      %p50 = por %p48, %p49
      %p51 = scmp.ne.s32.totalorder %s37, %s38
      %p52 = scmp.eq.s32.totalorder %s18, 1
      %p53 = por %p51, %p52
      %p55 = scmp.ne.s32.totalorder %s38, %s54
      %p56 = scmp.eq.s32.totalorder %s18, 0
      %p57 = por %p55, %p56
      %s58 = ssub.s32 %s19, %s31
      %p59 = scmp.eq.s32.totalorder %s58, 0
      %s61 = sadd.s32 %s60, 1
      %s62 = scalar_select %p59, %s60, %s61
      %p65 = pneg %p59
      %p66 = scmp.eq.s32.totalorder %s12, 1
      %p67 = por %p65, %p66
      %p68 = scmp.ne.s32.totalorder %s60, %s63
      %p69 = scmp.eq.s32.totalorder %s12, 0
      %p70 = por %p68, %p69
      %p71 = scmp.ne.s32.totalorder %s60, %s63
      %p72 = scmp.eq.s32.totalorder %s17, 1
      %p73 = por %p71, %p72
      %p74 = scmp.ne.s32.totalorder %s63, %s64
      %p75 = scmp.eq.s32.totalorder %s17, 0
      %p76 = por %p74, %p75
      %p77 = scmp.ne.s32.totalorder %s63, %s64
      %p78 = scmp.eq.s32.totalorder %s18, 1
      %p79 = por %p77, %p78
      %p81 = scmp.ne.s32.totalorder %s64, %s80
      %p82 = scmp.eq.s32.totalorder %s18, 0
      %p83 = por %p81, %p82
      %s84 = ssub.s32 %s19, %s31
      %p85 = scmp.eq.s32.totalorder %s84, 0
      %s87 = sadd.s32 %s86, 1
      %s88 = scalar_select %p85, %s86, %s87
      %p91 = pneg %p85
      %p92 = scmp.eq.s32.totalorder %s12, 1
      %p93 = por %p91, %p92
      %p94 = scmp.ne.s32.totalorder %s86, %s89
      %p95 = scmp.eq.s32.totalorder %s12, 0
      %p96 = por %p94, %p95
      %p97 = scmp.ne.s32.totalorder %s86, %s89
      %p98 = scmp.eq.s32.totalorder %s17, 1
      %p99 = por %p97, %p98
      %p100 = scmp.ne.s32.totalorder %s89, %s90
      %p101 = scmp.eq.s32.totalorder %s17, 0
      %p102 = por %p100, %p101
      %p103 = scmp.ne.s32.totalorder %s89, %s90
      %p104 = scmp.eq.s32.totalorder %s18, 1
      %p105 = por %p103, %p104
      %p107 = scmp.ne.s32.totalorder %s90, %s106
      %p108 = scmp.eq.s32.totalorder %s18, 0
      %p109 = por %p107, %p108
      %s110 = ssub.s32 %s20, %s27
      %s111 = ssub.s32 %s19, %s31
      %s112 = sor.u32 %s110, %s111
      %p113 = scmp.eq.s32.totalorder %s112, 0
      %s115 = sadd.s32 %s114, 1
      %s116 = scalar_select %p113, %s114, %s115
      %p119 = pneg %p113
      %p120 = scmp.eq.s32.totalorder %s12, 1
      %p121 = por %p119, %p120
      %p122 = scmp.ne.s32.totalorder %s114, %s117
      %p123 = scmp.eq.s32.totalorder %s12, 0
      %p124 = por %p122, %p123
      %p125 = scmp.ne.s32.totalorder %s114, %s117
      %p126 = scmp.eq.s32.totalorder %s17, 1
      %p127 = por %p125, %p126
      %p128 = scmp.ne.s32.totalorder %s117, %s118
      %p129 = scmp.eq.s32.totalorder %s17, 0
      %p130 = por %p128, %p129
      %p131 = scmp.ne.s32.totalorder %s117, %s118
      %p132 = scmp.eq.s32.totalorder %s18, 1
      %p133 = por %p131, %p132
      %p135 = scmp.ne.s32.totalorder %s118, %s134
      %p136 = scmp.eq.s32.totalorder %s18, 0
      %p137 = por %p135, %p136
      %p138 = scmp.le.s32.totalorder 1, %s12
      %p139 = scmp.lt.s32.totalorder %s12, 3
      %p140 = pnand %p138, %p139
      %p141 = pneg %p140
      // Predicated region
      $region9: #{tpu_custom_call.1} parent=5 // pred_check
        _
      $region10: #{tpu_custom_call.1} parent=5 // pred_check_branch
        %143 = sbr.rel (%p140) target = $region12
      $region11: #{tpu_custom_call.1} parent=5 // pred_region
        %s144 = ssub.s32 %s12, 1
        // Predicated region
        $region13: #{tpu_custom_call.1} parent=11 // pred_check
          %p145 = pneg %p76
        $region14: #{tpu_custom_call.1} parent=11 // pred_check_branch
          %147 = sbr.rel (%p145) target = $region16
        $region15: #{tpu_custom_call.1} parent=11 // pred_region
          %p148 = scmp.lt.s32.totalorder %s21, 0
          %s149 = scalar_select %p148, %s21, 0
          %s150 = smul.addr %s149, 4
          %s151 = scalar_lea.vmem %s1, %s150
        $region16: #{tpu_custom_call.1} parent=11 // pred_fallthru
          _
        // Predicated region
        $region17: #{tpu_custom_call.1} parent=11 // pred_check
          %p152 = pneg %p102
        $region18: #{tpu_custom_call.1} parent=11 // pred_check_branch
          %154 = sbr.rel (%p152) target = $region20
        $region19: #{tpu_custom_call.1} parent=11 // pred_region
          %p155 = scmp.lt.s32.totalorder %s21, 0
          %s156 = scalar_select %p155, %s21, 0
          %s157 = scalar_lea.vmem %s2, %s156
        $region20: #{tpu_custom_call.1} parent=11 // pred_fallthru
          _
      $region12: #{tpu_custom_call.1} parent=5 // pred_fallthru
        _
      %p158 = scmp.lt.s32.totalorder %s12, 2
      // Predicated region
      $region21: #{tpu_custom_call.1} parent=5 // pred_check
        %p159 = pneg %p158
      $region22: #{tpu_custom_call.1} parent=5 // pred_check_branch
        %161 = sbr.rel (%p159) target = $region24
      $region23: #{tpu_custom_call.1} parent=5 // pred_region
        // Predicated region
        $region25: #{tpu_custom_call.1} parent=23 // pred_check
          %p162 = pneg %p44
        $region26: #{tpu_custom_call.1} parent=23 // pred_check_branch
          %164 = sbr.rel (%p162) target = $region28
        $region27: #{tpu_custom_call.1} parent=23 // pred_region
          %s165 = smul.u32 2, %s20
          %p166 = scmp.lt.s32.totalorder %s165, 3
          %s167 = scalar_select %p166, %s165, 3
          %s168 = smul.addr %s167, 15
          %s169 = smul.addr %s168, 4
          %s170 = scalar_lea.vmem %s0, %s169
          %s171 = smul.u32 2, %s20
        $region28: #{tpu_custom_call.1} parent=23 // pred_fallthru
          _
      $region24: #{tpu_custom_call.1} parent=5 // pred_fallthru
        _
      %p172 = scmp.le.s32.totalorder 1, %s12
      %p173 = scmp.lt.s32.totalorder %s12, 3
      %p174 = pnand %p172, %p173
      %p175 = pneg %p174
      // Predicated region
      $region29: #{tpu_custom_call.1} parent=5 // pred_check
        _
      $region30: #{tpu_custom_call.1} parent=5 // pred_check_branch
        %177 = sbr.rel (%p174) target = $region32
      $region31: #{tpu_custom_call.1} parent=5 // pred_region
        %s178 = ssub.s32 %s12, 1
        %s179 = smul.u32 2, %s22
        %p180 = scmp.lt.s32.totalorder %s179, 3
        %s181 = scalar_select %p180, %s179, 3
        %s182 = smul.addr %s181, 15
        %s183 = smul.addr %s182, 4
        %s184 = scalar_lea.vmem %s0, %s183
        %p185 = pneg %p50
        %p186 = pneg %p47
        %p187 = scmp.lt.s32.totalorder %s21, 0
        %s188 = scalar_select %p187, %s21, 0
        %s189 = smul.addr %s188, 4
        %s190 = scalar_lea.vmem %s1, %s189
        %p191 = pneg %p76
        %p192 = pneg %p73
        %p193 = scmp.lt.s32.totalorder %s21, 0
        %s194 = scalar_select %p193, %s21, 0
        %s195 = scalar_lea.vmem %s2, %s194
        %p196 = pneg %p102
        %p197 = pneg %p99
        %p198 = pneg %p130
        %p199 = pneg %p127
        %s200 = sand.u32 %s117, 1
        %s201 = scalar_lea.sflag [#allocation3], %s200
        %s202 = sand.u32 %s117, 1
        %s203 = smul.addr %s202, 32
        %s204 = scalar_lea.vmem [#allocation2], %s203
        %s205 = smul.u32 2, %s22
        %p206 = scmp.lt.s32.totalorder %s205, 3
        %s207 = scalar_select %p206, %s205, 3
        %s208 = smul.addr %s207, 15
        %s209 = smul.addr %s208, 4
        %s210 = scalar_lea.vmem %s0, %s209
        %s211 = smul.u32 2, %s22
        %p212 = scmp.lt.s32.totalorder %s21, 0
        %s213 = scalar_select %p212, %s21, 0
        %s214 = smul.addr %s213, 4
        %s215 = scalar_lea.vmem %s1, %s214
        %p216 = scmp.lt.s32.totalorder %s21, 0
        %s217 = scalar_select %p216, %s21, 0
        %s218 = scalar_lea.vmem %s2, %s217
        %s219 = smul.u32 2, %s22
        %v220 = vld [vmem:[%s210] sm:$0xf]
        %v221 = vld [vmem:[%s210 + $0x4] sm:$0xf]
        %v222 = vld [vmem:[%s210 + $0x8] sm:$0xf]
        %v223 = vld [vmem:[%s210 + $0xc] sm:$0xf]
        %v224 = vld [vmem:[%s210 + $0x3c] sm:$0xf]
        %v225 = vld [vmem:[%s210 + $0x40] sm:$0xf]
        %v226 = vld [vmem:[%s210 + $0x44] sm:$0xf]
        %v227 = vld [vmem:[%s210 + $0x48] sm:$0xf]
        %v228 = vunpack.c.l.bf16 %v220
        %v229 = vunpack.c.l.bf16 %v221
        %v230 = vunpack.c.l.bf16 %v222
        %v231 = vunpack.c.l.bf16 %v223
        %v232 = vunpack.c.l.bf16 %v224
        %v233 = vunpack.c.l.bf16 %v225
        %v234 = vunpack.c.l.bf16 %v226
        %v235 = vunpack.c.l.bf16 %v227
        %v236 = vld [vmem:[%s215] sm:$0x1]
        %v237 = vunpack.c.l.bf16 %v236
        %239 = vset.pattern.permute.xlu0 0
        %240 = vperm.xlu0 %239, %v228
        %v241 = vpop.permute.xlu0 %240
        %244 = vset.pattern.permute.xlu0 0
        %245 = vperm.xlu0 %244, %v229
        %v246 = vpop.permute.xlu0 %245
        %249 = vset.pattern.permute.xlu0 0
        %250 = vperm.xlu0 %249, %v230
        %v251 = vpop.permute.xlu0 %250
        %254 = vset.pattern.permute.xlu0 0
        %255 = vperm.xlu0 %254, %v231
        %v256 = vpop.permute.xlu0 %255
        %259 = vset.pattern.permute.xlu0 0
        %260 = vperm.xlu0 %259, %v232
        %v261 = vpop.permute.xlu0 %260
        %264 = vset.pattern.permute.xlu0 0
        %265 = vperm.xlu0 %264, %v233
        %v266 = vpop.permute.xlu0 %265
        %269 = vset.pattern.permute.xlu0 0
        %270 = vperm.xlu0 %269, %v234
        %v271 = vpop.permute.xlu0 %270
        %274 = vset.pattern.permute.xlu0 0
        %275 = vperm.xlu0 %274, %v235
        %v276 = vpop.permute.xlu0 %275
        %v278 = vperm.slane %v237, 0
        %v279 = vmul.f32 %v241, %v278
        %v280 = vmul.f32 %v246, %v278
        %v281 = vmul.f32 %v251, %v278
        %v282 = vmul.f32 %v256, %v278
        %v283 = vmul.f32 %v261, %v278
        %v284 = vmul.f32 %v266, %v278
        %v285 = vmul.f32 %v271, %v278
        %v286 = vmul.f32 %v276, %v278
        %s287 = scalar_lea.vmem %s210, 20
        %v288 = vld [vmem:[%s287] sm:$0xf]
        %v289 = vld [vmem:[%s287 + $0x4] sm:$0xf]
        %v290 = vld [vmem:[%s287 + $0x8] sm:$0xf]
        %v291 = vld [vmem:[%s287 + $0xc] sm:$0xf]
        %v292 = vld [vmem:[%s287 + $0x3c] sm:$0xf]
        %v293 = vld [vmem:[%s287 + $0x40] sm:$0xf]
        %v294 = vld [vmem:[%s287 + $0x44] sm:$0xf]
        %v295 = vld [vmem:[%s287 + $0x48] sm:$0xf]
        %v296 = vunpack.c.l.bf16 %v288
        %v297 = vunpack.c.l.bf16 %v289
        %v298 = vunpack.c.l.bf16 %v290
        %v299 = vunpack.c.l.bf16 %v291
        %v300 = vunpack.c.l.bf16 %v292
        %v301 = vunpack.c.l.bf16 %v293
        %v302 = vunpack.c.l.bf16 %v294
        %v303 = vunpack.c.l.bf16 %v295
        %305 = vset.pattern.permute.xlu0 0
        %306 = vperm.xlu0 %305, %v296
        %v307 = vpop.permute.xlu0 %306
        %310 = vset.pattern.permute.xlu0 0
        %311 = vperm.xlu0 %310, %v297
        %v312 = vpop.permute.xlu0 %311
        %315 = vset.pattern.permute.xlu0 0
        %316 = vperm.xlu0 %315, %v298
        %v317 = vpop.permute.xlu0 %316
        %320 = vset.pattern.permute.xlu0 0
        %321 = vperm.xlu0 %320, %v299
        %v322 = vpop.permute.xlu0 %321
        %325 = vset.pattern.permute.xlu0 0
        %326 = vperm.xlu0 %325, %v300
        %v327 = vpop.permute.xlu0 %326
        %330 = vset.pattern.permute.xlu0 0
        %331 = vperm.xlu0 %330, %v301
        %v332 = vpop.permute.xlu0 %331
        %335 = vset.pattern.permute.xlu0 0
        %336 = vperm.xlu0 %335, %v302
        %v337 = vpop.permute.xlu0 %336
        %340 = vset.pattern.permute.xlu0 0
        %341 = vperm.xlu0 %340, %v303
        %v342 = vpop.permute.xlu0 %341
        %v344 = vperm.slane %v237, 1
        %v345 = vmul.f32 %v307, %v344
        %v346 = vmul.f32 %v312, %v344
        %v347 = vmul.f32 %v317, %v344
        %v348 = vmul.f32 %v322, %v344
        %v349 = vmul.f32 %v327, %v344
        %v350 = vmul.f32 %v332, %v344
        %v351 = vmul.f32 %v337, %v344
        %v352 = vmul.f32 %v342, %v344
        %v353 = vadd.f32 %v279, %v345
        %v354 = vadd.f32 %v280, %v346
        %v355 = vadd.f32 %v281, %v347
        %v356 = vadd.f32 %v282, %v348
        %v357 = vadd.f32 %v283, %v349
        %v358 = vadd.f32 %v284, %v350
        %v359 = vadd.f32 %v285, %v351
        %v360 = vadd.f32 %v286, %v352
        %s361 = scalar_lea.vmem %s210, 40
        %v362 = vld [vmem:[%s361] sm:$0xf]
        %v363 = vld [vmem:[%s361 + $0x4] sm:$0xf]
        %v364 = vld [vmem:[%s361 + $0x8] sm:$0xf]
        %v365 = vld [vmem:[%s361 + $0xc] sm:$0xf]
        %v366 = vld [vmem:[%s361 + $0x3c] sm:$0xf]
        %v367 = vld [vmem:[%s361 + $0x40] sm:$0xf]
        %v368 = vld [vmem:[%s361 + $0x44] sm:$0xf]
        %v369 = vld [vmem:[%s361 + $0x48] sm:$0xf]
        %v370 = vunpack.c.l.bf16 %v362
        %v371 = vunpack.c.l.bf16 %v363
        %v372 = vunpack.c.l.bf16 %v364
        %v373 = vunpack.c.l.bf16 %v365
        %v374 = vunpack.c.l.bf16 %v366
        %v375 = vunpack.c.l.bf16 %v367
        %v376 = vunpack.c.l.bf16 %v368
        %v377 = vunpack.c.l.bf16 %v369
        %v378 = vld [vmem:[%s215] sm:$0x2]
        %v379 = vunpack.c.l.bf16 %v378
        %381 = vset.pattern.permute.xlu0 0
        %382 = vperm.xlu0 %381, %v370
        %v383 = vpop.permute.xlu0 %382
        %386 = vset.pattern.permute.xlu0 0
        %387 = vperm.xlu0 %386, %v371
        %v388 = vpop.permute.xlu0 %387
        %391 = vset.pattern.permute.xlu0 0
        %392 = vperm.xlu0 %391, %v372
        %v393 = vpop.permute.xlu0 %392
        %396 = vset.pattern.permute.xlu0 0
        %397 = vperm.xlu0 %396, %v373
        %v398 = vpop.permute.xlu0 %397
        %401 = vset.pattern.permute.xlu0 0
        %402 = vperm.xlu0 %401, %v374
        %v403 = vpop.permute.xlu0 %402
        %406 = vset.pattern.permute.xlu0 0
        %407 = vperm.xlu0 %406, %v375
        %v408 = vpop.permute.xlu0 %407
        %411 = vset.pattern.permute.xlu0 0
        %412 = vperm.xlu0 %411, %v376
        %v413 = vpop.permute.xlu0 %412
        %416 = vset.pattern.permute.xlu0 0
        %417 = vperm.xlu0 %416, %v377
        %v418 = vpop.permute.xlu0 %417
        %v420 = vperm.slane %v379, 2
        %v421 = vmul.f32 %v383, %v420
        %v422 = vmul.f32 %v388, %v420
        %v423 = vmul.f32 %v393, %v420
        %v424 = vmul.f32 %v398, %v420
        %v425 = vmul.f32 %v403, %v420
        %v426 = vmul.f32 %v408, %v420
        %v427 = vmul.f32 %v413, %v420
        %v428 = vmul.f32 %v418, %v420
        %v429 = vadd.f32 %v353, %v421
        %v430 = vadd.f32 %v354, %v422
        %v431 = vadd.f32 %v355, %v423
        %v432 = vadd.f32 %v356, %v424
        %v433 = vadd.f32 %v357, %v425
        %v434 = vadd.f32 %v358, %v426
        %v435 = vadd.f32 %v359, %v427
        %v436 = vadd.f32 %v360, %v428
        %v437 = vld [vmem:[%s210] sm:$0xf]
        %v438 = vld [vmem:[%s210 + $0x4] sm:$0xf]
        %v439 = vld [vmem:[%s210 + $0x8] sm:$0xf]
        %v440 = vld [vmem:[%s210 + $0xc] sm:$0xf]
        %v441 = vld [vmem:[%s210 + $0x10] sm:$0x1]
        %v442 = vld [vmem:[%s210 + $0x3c] sm:$0xf]
        %v443 = vld [vmem:[%s210 + $0x40] sm:$0xf]
        %v444 = vld [vmem:[%s210 + $0x44] sm:$0xf]
        %v445 = vld [vmem:[%s210 + $0x48] sm:$0xf]
        %v446 = vld [vmem:[%s210 + $0x4c] sm:$0x1]
        %vm447 = vsmask.f32 3328
        %vm448 = vsmask.f32 7440
        %vm449 = vmor %vm447, %vm448
        %v451 = vshrl.u32 %v437, 16
        %v453 = vrot.slane %v451, 4
        %v454 = vshll.u32 %v437, 16
        %v456 = vrot.slane %v454, 5
        %v457 = vor.u32 %v453, %v456
        %v458 = vrot.slane %v457, 4
        %v460 = vshll.u32 %v438, 16
        %v462 = vrot.slane %v460, 5
        %v463 = vsel %vm449, %v458, %v462
        %v464 = vshrl.u32 %v438, 16
        %v466 = vrot.slane %v464, 4
        %v467 = vor.u32 %v466, %v462
        %v468 = vrot.slane %v467, 4
        %v470 = vshll.u32 %v439, 16
        %v472 = vrot.slane %v470, 5
        %v473 = vsel %vm449, %v468, %v472
        %v474 = vshrl.u32 %v439, 16
        %v476 = vrot.slane %v474, 4
        %v477 = vor.u32 %v476, %v472
        %v478 = vrot.slane %v477, 4
        %v480 = vshll.u32 %v440, 16
        %v482 = vrot.slane %v480, 5
        %v483 = vsel %vm449, %v478, %v482
        %v484 = vshrl.u32 %v440, 16
        %v486 = vrot.slane %v484, 4
        %v487 = vor.u32 %v486, %v482
        %v488 = vrot.slane %v487, 4
        %v490 = vshll.u32 %v441, 16
        %v492 = vrot.slane %v490, 5
        %v493 = vsel %vm449, %v488, %v492
        %v495 = vshrl.u32 %v442, 16
        %v497 = vrot.slane %v495, 4
        %v498 = vshll.u32 %v442, 16
        %v500 = vrot.slane %v498, 5
        %v501 = vor.u32 %v497, %v500
        %v502 = vrot.slane %v501, 4
        %v504 = vshll.u32 %v443, 16
        %v506 = vrot.slane %v504, 5
        %v507 = vsel %vm449, %v502, %v506
        %v508 = vshrl.u32 %v443, 16
        %v510 = vrot.slane %v508, 4
        %v511 = vor.u32 %v510, %v506
        %v512 = vrot.slane %v511, 4
        %v514 = vshll.u32 %v444, 16
        %v516 = vrot.slane %v514, 5
        %v517 = vsel %vm449, %v512, %v516
        %v518 = vshrl.u32 %v444, 16
        %v520 = vrot.slane %v518, 4
        %v521 = vor.u32 %v520, %v516
        %v522 = vrot.slane %v521, 4
        %v524 = vshll.u32 %v445, 16
        %v526 = vrot.slane %v524, 5
        %v527 = vsel %vm449, %v522, %v526
        %v528 = vshrl.u32 %v445, 16
        %v530 = vrot.slane %v528, 4
        %v531 = vor.u32 %v530, %v526
        %v532 = vrot.slane %v531, 4
        %v534 = vshll.u32 %v446, 16
        %v536 = vrot.slane %v534, 5
        %v537 = vsel %vm449, %v532, %v536
        %v546 = vunpack.c.l.bf16 %v463
        %v547 = vunpack.c.l.bf16 %v473
        %v548 = vunpack.c.l.bf16 %v483
        %v549 = vunpack.c.l.bf16 %v493
        %v550 = vunpack.c.l.bf16 %v507
        %v551 = vunpack.c.l.bf16 %v517
        %v552 = vunpack.c.l.bf16 %v527
        %v553 = vunpack.c.l.bf16 %v537
        %555 = vset.pattern.permute.xlu0 0
        %556 = vperm.xlu0 %555, %v546
        %v557 = vpop.permute.xlu0 %556
        %560 = vset.pattern.permute.xlu0 0
        %561 = vperm.xlu0 %560, %v547
        %v562 = vpop.permute.xlu0 %561
        %565 = vset.pattern.permute.xlu0 0
        %566 = vperm.xlu0 %565, %v548
        %v567 = vpop.permute.xlu0 %566
        %570 = vset.pattern.permute.xlu0 0
        %571 = vperm.xlu0 %570, %v549
        %v572 = vpop.permute.xlu0 %571
        %575 = vset.pattern.permute.xlu0 0
        %576 = vperm.xlu0 %575, %v550
        %v577 = vpop.permute.xlu0 %576
        %580 = vset.pattern.permute.xlu0 0
        %581 = vperm.xlu0 %580, %v551
        %v582 = vpop.permute.xlu0 %581
        %585 = vset.pattern.permute.xlu0 0
        %586 = vperm.xlu0 %585, %v552
        %v587 = vpop.permute.xlu0 %586
        %590 = vset.pattern.permute.xlu0 0
        %591 = vperm.xlu0 %590, %v553
        %v592 = vpop.permute.xlu0 %591
        %v594 = vperm.slane %v379, 3
        %v595 = vmul.f32 %v557, %v594
        %v596 = vmul.f32 %v562, %v594
        %v597 = vmul.f32 %v567, %v594
        %v598 = vmul.f32 %v572, %v594
        %v599 = vmul.f32 %v577, %v594
        %v600 = vmul.f32 %v582, %v594
        %v601 = vmul.f32 %v587, %v594
        %v602 = vmul.f32 %v592, %v594
        %v603 = vadd.f32 %v429, %v595
        %v604 = vadd.f32 %v430, %v596
        %v605 = vadd.f32 %v431, %v597
        %v606 = vadd.f32 %v432, %v598
        %v607 = vadd.f32 %v433, %v599
        %v608 = vadd.f32 %v434, %v600
        %v609 = vadd.f32 %v435, %v601
        %v610 = vadd.f32 %v436, %v602
        %v611 = vld [vmem:[%s287] sm:$0xf]
        %v612 = vld [vmem:[%s287 + $0x4] sm:$0xf]
        %v613 = vld [vmem:[%s287 + $0x8] sm:$0xf]
        %v614 = vld [vmem:[%s287 + $0xc] sm:$0xf]
        %v615 = vld [vmem:[%s287 + $0x10] sm:$0x1]
        %v616 = vld [vmem:[%s287 + $0x3c] sm:$0xf]
        %v617 = vld [vmem:[%s287 + $0x40] sm:$0xf]
        %v618 = vld [vmem:[%s287 + $0x44] sm:$0xf]
        %v619 = vld [vmem:[%s287 + $0x48] sm:$0xf]
        %v620 = vld [vmem:[%s287 + $0x4c] sm:$0x1]
        %v622 = vshrl.u32 %v611, 16
        %v624 = vrot.slane %v622, 4
        %v625 = vshll.u32 %v611, 16
        %v627 = vrot.slane %v625, 5
        %v628 = vor.u32 %v624, %v627
        %v629 = vrot.slane %v628, 4
        %v631 = vshll.u32 %v612, 16
        %v633 = vrot.slane %v631, 5
        %v634 = vsel %vm449, %v629, %v633
        %v635 = vshrl.u32 %v612, 16
        %v637 = vrot.slane %v635, 4
        %v638 = vor.u32 %v637, %v633
        %v639 = vrot.slane %v638, 4
        %v641 = vshll.u32 %v613, 16
        %v643 = vrot.slane %v641, 5
        %v644 = vsel %vm449, %v639, %v643
        %v645 = vshrl.u32 %v613, 16
        %v647 = vrot.slane %v645, 4
        %v648 = vor.u32 %v647, %v643
        %v649 = vrot.slane %v648, 4
        %v651 = vshll.u32 %v614, 16
        %v653 = vrot.slane %v651, 5
        %v654 = vsel %vm449, %v649, %v653
        %v655 = vshrl.u32 %v614, 16
        %v657 = vrot.slane %v655, 4
        %v658 = vor.u32 %v657, %v653
        %v659 = vrot.slane %v658, 4
        %v661 = vshll.u32 %v615, 16
        %v663 = vrot.slane %v661, 5
        %v664 = vsel %vm449, %v659, %v663
        %v666 = vshrl.u32 %v616, 16
        %v668 = vrot.slane %v666, 4
        %v669 = vshll.u32 %v616, 16
        %v671 = vrot.slane %v669, 5
        %v672 = vor.u32 %v668, %v671
        %v673 = vrot.slane %v672, 4
        %v675 = vshll.u32 %v617, 16
        %v677 = vrot.slane %v675, 5
        %v678 = vsel %vm449, %v673, %v677
        %v679 = vshrl.u32 %v617, 16
        %v681 = vrot.slane %v679, 4
        %v682 = vor.u32 %v681, %v677
        %v683 = vrot.slane %v682, 4
        %v685 = vshll.u32 %v618, 16
        %v687 = vrot.slane %v685, 5
        %v688 = vsel %vm449, %v683, %v687
        %v689 = vshrl.u32 %v618, 16
        %v691 = vrot.slane %v689, 4
        %v692 = vor.u32 %v691, %v687
        %v693 = vrot.slane %v692, 4
        %v695 = vshll.u32 %v619, 16
        %v697 = vrot.slane %v695, 5
        %v698 = vsel %vm449, %v693, %v697
        %v699 = vshrl.u32 %v619, 16
        %v701 = vrot.slane %v699, 4
        %v702 = vor.u32 %v701, %v697
        %v703 = vrot.slane %v702, 4
        %v705 = vshll.u32 %v620, 16
        %v707 = vrot.slane %v705, 5
        %v708 = vsel %vm449, %v703, %v707
        %v717 = vunpack.c.l.bf16 %v634
        %v718 = vunpack.c.l.bf16 %v644
        %v719 = vunpack.c.l.bf16 %v654
        %v720 = vunpack.c.l.bf16 %v664
        %v721 = vunpack.c.l.bf16 %v678
        %v722 = vunpack.c.l.bf16 %v688
        %v723 = vunpack.c.l.bf16 %v698
        %v724 = vunpack.c.l.bf16 %v708
        %v725 = vld [vmem:[%s215] sm:$0x4]
        %v726 = vunpack.c.l.bf16 %v725
        %728 = vset.pattern.permute.xlu0 0
        %729 = vperm.xlu0 %728, %v717
        %v730 = vpop.permute.xlu0 %729
        %733 = vset.pattern.permute.xlu0 0
        %734 = vperm.xlu0 %733, %v718
        %v735 = vpop.permute.xlu0 %734
        %738 = vset.pattern.permute.xlu0 0
        %739 = vperm.xlu0 %738, %v719
        %v740 = vpop.permute.xlu0 %739
        %743 = vset.pattern.permute.xlu0 0
        %744 = vperm.xlu0 %743, %v720
        %v745 = vpop.permute.xlu0 %744
        %748 = vset.pattern.permute.xlu0 0
        %749 = vperm.xlu0 %748, %v721
        %v750 = vpop.permute.xlu0 %749
        %753 = vset.pattern.permute.xlu0 0
        %754 = vperm.xlu0 %753, %v722
        %v755 = vpop.permute.xlu0 %754
        %758 = vset.pattern.permute.xlu0 0
        %759 = vperm.xlu0 %758, %v723
        %v760 = vpop.permute.xlu0 %759
        %763 = vset.pattern.permute.xlu0 0
        %764 = vperm.xlu0 %763, %v724
        %v765 = vpop.permute.xlu0 %764
        %v767 = vperm.slane %v726, 4
        %v768 = vmul.f32 %v730, %v767
        %v769 = vmul.f32 %v735, %v767
        %v770 = vmul.f32 %v740, %v767
        %v771 = vmul.f32 %v745, %v767
        %v772 = vmul.f32 %v750, %v767
        %v773 = vmul.f32 %v755, %v767
        %v774 = vmul.f32 %v760, %v767
        %v775 = vmul.f32 %v765, %v767
        %v776 = vadd.f32 %v603, %v768
        %v777 = vadd.f32 %v604, %v769
        %v778 = vadd.f32 %v605, %v770
        %v779 = vadd.f32 %v606, %v771
        %v780 = vadd.f32 %v607, %v772
        %v781 = vadd.f32 %v608, %v773
        %v782 = vadd.f32 %v609, %v774
        %v783 = vadd.f32 %v610, %v775
        %v784 = vld [vmem:[%s218] sm:$0x1]
        %v786 = vperm.slane %v784, 0
        %v788 = vadd.f32 %v776, %v786
        %v789 = vadd.f32 %v777, %v786
        %v790 = vadd.f32 %v778, %v786
        %v791 = vadd.f32 %v779, %v786
        %v792 = vadd.f32 %v780, %v786
        %v793 = vadd.f32 %v781, %v786
        %v794 = vadd.f32 %v782, %v786
        %v795 = vadd.f32 %v783, %v786
        %vm796 = vcmp.ge.f32.partialorder %v788, 0.0
        %vm797 = vcmp.ge.f32.partialorder %v789, 0.0
        %vm798 = vcmp.ge.f32.partialorder %v790, 0.0
        %vm799 = vcmp.ge.f32.partialorder %v791, 0.0
        %vm800 = vcmp.ge.f32.partialorder %v792, 0.0
        %vm801 = vcmp.ge.f32.partialorder %v793, 0.0
        %vm802 = vcmp.ge.f32.partialorder %v794, 0.0
        %vm803 = vcmp.ge.f32.partialorder %v795, 0.0
        %v804 = vmul.f32 %v788, 0.1
        %v805 = vmul.f32 %v789, 0.1
        %v806 = vmul.f32 %v790, 0.1
        %v807 = vmul.f32 %v791, 0.1
        %v808 = vmul.f32 %v792, 0.1
        %v809 = vmul.f32 %v793, 0.1
        %v810 = vmul.f32 %v794, 0.1
        %v811 = vmul.f32 %v795, 0.1
        %v812 = vsel %vm796, %v788, %v804
        %v813 = vsel %vm797, %v789, %v805
        %v814 = vsel %vm798, %v790, %v806
        %v815 = vsel %vm799, %v791, %v807
        %v816 = vsel %vm800, %v792, %v808
        %v817 = vsel %vm801, %v793, %v809
        %v818 = vsel %vm802, %v794, %v810
        %v819 = vsel %vm803, %v795, %v811
        %v820 = vpack.c.bf16 %v812, %v812
        %v821 = vpack.c.bf16 %v813, %v813
        %v822 = vpack.c.bf16 %v814, %v814
        %v823 = vpack.c.bf16 %v815, %v815
        %v824 = vpack.c.bf16 %v816, %v816
        %v825 = vpack.c.bf16 %v817, %v817
        %v826 = vpack.c.bf16 %v818, %v818
        %v827 = vpack.c.bf16 %v819, %v819
        %vm828 = vcmask 257024
        %829 = vst.msk [vmem:[%s204] sm:$0xf] %vm828, %v820
        %830 = vst.msk [vmem:[%s204 + $0x4] sm:$0xf] %vm828, %v821
        %831 = vst.msk [vmem:[%s204 + $0x8] sm:$0xf] %vm828, %v822
        %832 = vst.msk [vmem:[%s204 + $0xc] sm:$0xf] %vm828, %v823
        %833 = vst.msk [vmem:[%s204 + $0x10] sm:$0xf] %vm828, %v824
        %834 = vst.msk [vmem:[%s204 + $0x14] sm:$0xf] %vm828, %v825
        %835 = vst.msk [vmem:[%s204 + $0x18] sm:$0xf] %vm828, %v826
        %836 = vst.msk [vmem:[%s204 + $0x1c] sm:$0xf] %vm828, %v827
        %s837 = sand.u32 %s117, 1
        %s838 = scalar_lea.sflag [#allocation3], %s837
        %s839 = sand.u32 %s117, 1
        %s840 = smul.addr %s839, 32
        %s841 = scalar_lea.vmem [#allocation2], %s840
        // Predicated region
        $region33: #{tpu_custom_call.1} parent=31 // pred_check
          %p842 = pneg %p127
        $region34: #{tpu_custom_call.1} parent=31 // pred_check_branch
          %844 = sbr.rel (%p842) target = $region36
        $region35: #{tpu_custom_call.1} parent=31 // pred_region
          %s845 = smul.u32 2, %s22
          %847 = vsyncadd %s838, 0
          %s848 = smul.addr %s845, 4
          %s849 = sadd.s32 %s21, %s848
          %s850 = smul.addr %s849, 4
          %s851 = scalar_lea.hbm %s3, %s850
          %s852 = sshll.u32 %s841, 4
          %s853 = int_to_ptr.vmem [resolvable:$true] %s852
          %s854 = sshll.u32 %s851, 4
          %s855 = int_to_ptr.hbm [resolvable:$true] %s854
          %860 = dma.vmem_to_hbm [thread:$0]  %s853, 512, %s855, %s838, 64, 64, 4
        $region36: #{tpu_custom_call.1} parent=31 // pred_fallthru
          _
      $region32: #{tpu_custom_call.1} parent=5 // pred_fallthru
        _
      %p861 = scmp.le.s32.totalorder 2, %s12
      // Predicated region
      $region37: #{tpu_custom_call.1} parent=5 // pred_check
        %p862 = pneg %p861
      $region38: #{tpu_custom_call.1} parent=5 // pred_check_branch
        %864 = sbr.rel (%p862) target = $region40
      $region39: #{tpu_custom_call.1} parent=5 // pred_region
        %s865 = ssub.s32 %s12, 2
        // Predicated region
        $region41: #{tpu_custom_call.1} parent=39 // pred_check
          %p866 = pneg %p133
        $region42: #{tpu_custom_call.1} parent=39 // pred_check_branch
          %868 = sbr.rel (%p866) target = $region44
        $region43: #{tpu_custom_call.1} parent=39 // pred_region
          %s869 = sand.u32 %s118, 1
          %s870 = scalar_lea.sflag [#allocation3], %s869
          %s871 = sand.u32 %s118, 1
          %s872 = smul.addr %s871, 32
          %s873 = scalar_lea.vmem [#allocation2], %s872
          %875 = dma.done %s870, 512
        $region44: #{tpu_custom_call.1} parent=39 // pred_fallthru
          _
      $region40: #{tpu_custom_call.1} parent=5 // pred_fallthru
        _
    $region6: #{tpu_custom_call.1} parent=1 // loop_footer
      %s16 = sadd.s32 1, %s12
    $region7: #{tpu_custom_call.1} parent=1 // loop_footer_branch
      %11 = sbr.rel target = $region3
    $region8: #{tpu_custom_call.1} parent=1 // loop_exit
      _
    %876 = vsyncpa [#allocation3], 1
    %s877 = scalar_lea.sflag [#allocation3], 1
    %878 = vsyncpa %s877, 1

</llo_original>
